<compile_context>
chip_gen: v5e
topology: v5e:2x2
jax: 0.10.0
libtpu: 0.0.40
codegen_flags: <defaults>
</compile_context>

<pallas_src>
import math
import jax
import jax.numpy as jnp
from jax.experimental import pallas as pl
from jax.experimental.pallas import tpu as pltpu

# ---------------- model hyperparameters (small, synthetic config) -----------
VOCAB = 100
VOCAB_PAD = 128      # word-emb table padded to a lane-aligned row count
TYPE_VOCAB = 2
MAX_POS = 16
H = 32               # hidden_size
NUM_HEADS = 2
DH = H // NUM_HEADS
FFN = 64
NUM_LAYERS = 2
LN_EPS = 1e-12


# ---------------- in-kernel helpers -----------------------------------------
def _layernorm(x, g, b, eps=LN_EPS):
    mu = jnp.mean(x, axis=-1, keepdims=True)
    xc = x - mu
    var = jnp.mean(xc * xc, axis=-1, keepdims=True)
    return xc * jax.lax.rsqrt(var + eps) * g + b


def _gelu(x):
    # TODO(synk): HF BERT uses exact erf GELU; tanh approximation is used here
    # to keep the transcendental on the guaranteed EUP tanh path.
    c = math.sqrt(2.0 / math.pi)
    return 0.5 * x * (1.0 + jnp.tanh(c * (x + 0.044715 * x * x * x)))


# ---------------- fused forward body (shared by infer / train kernels) -------
def _encoder_cls_logits(ids_ref, seg_ref, mask_ref, wemb_ref, aux_ref,
                        wqkv_ref, bqkv_ref, wo_ref, vecs_ref,
                        w1_ref, b1_ref, w2_ref, cls_ref):
    B, S = mask_ref.shape
    N = B * S
    NHB = NUM_HEADS * B
    LNH = NUM_LAYERS * NUM_HEADS

    # ---- embeddings, gathered in-kernel ----
    # word: one-hot (N, VOCAB_PAD) built from a 2D iota, then one MXU matmul.
    ids = ids_ref[...]                                              # (N,1) i32
    onehot = (ids == jax.lax.broadcasted_iota(
        jnp.int32, (N, VOCAB_PAD), 1)).astype(jnp.float32)          # (N,Vp)
    we = jnp.dot(onehot, wemb_ref[...],
                 preferred_element_type=jnp.float32)                # (N,H)

    # position: first S rows of the packed aux table, stacked B times (sublane
    # concat, 8-row aligned -> free).
    pos = aux_ref[0:S, :]                                           # (S,H)
    pe = jnp.concatenate([pos] * B, axis=0)                         # (N,H)

    # token type: arithmetic select between the two type rows.
    segf = seg_ref[...].astype(jnp.float32)                         # (N,1)
    t0 = aux_ref[MAX_POS:MAX_POS + 1, :]                            # (1,H)
    t1 = aux_ref[MAX_POS + 1:MAX_POS + 2, :]                        # (1,H)
    te = t0 + segf * (t1 - t0)                                      # (N,H)

    x = _layernorm(we + pe + te,
                   aux_ref[MAX_POS + 2:MAX_POS + 3, :],
                   aux_ref[MAX_POS + 3:MAX_POS + 4, :])             # (N,H) f32

    # additive attention mask, replicated over heads along the einsum batch axis
    maskf = mask_ref[...].astype(jnp.float32)                       # (B,S)
    maskf = jnp.concatenate([maskf] * NUM_HEADS, axis=0)            # (NHB,S)
    amask = ((1.0 - maskf) * (-1e9)).reshape(NHB, 1, S)             # (NHB,1,S)

    scale = 1.0 / math.sqrt(DH)

    # ---- NUM_LAYERS post-LN BERT layers, activations resident in VMEM ----
    # TODO(synk): at realistic depth, switch this unrolled Python loop to a
    # lax.fori_loop / layer grid axis and stream per-layer weights (bf16)
    # with Buffered BlockSpecs so the design fits v7x's 64 MiB VMEM.
    for l in range(NUM_LAYERS):
        x16 = x.astype(jnp.bfloat16)

        # per-head QKV projections (weights pre-split per head -> no lane
        # slicing), stacked head-major along the leading axis (free, aligned).
        qkv = []
        for which in range(3):                                      # q, k, v
            parts = []
            for hd in range(NUM_HEADS):
                idx = which * LNH + l * NUM_HEADS + hd
                p_h = jnp.dot(x16, wqkv_ref[idx],
                              preferred_element_type=jnp.float32) + bqkv_ref[idx]
                parts.append(p_h)                                   # (N,DH)
            qkv.append(jnp.concatenate(parts, axis=0).reshape(NHB, S, DH))
        q, k, v = qkv                                               # (NHB,S,DH)

        # single head-batched attention contraction for all heads & batches
        s = jnp.einsum('bqd,bkd->bqk', q, k,
                       preferred_element_type=jnp.float32) * scale + amask
        m = jnp.max(s, axis=-1, keepdims=True)
        p = jnp.exp(s - m)
        p = p * pl.reciprocal(jnp.sum(p, axis=-1, keepdims=True), approx=True)
        ctx = jnp.einsum('bqk,bkd->bqd', p, v,
                         preferred_element_type=jnp.float32)        # (NHB,S,DH)
        ctx2d = ctx.reshape(NHB * S, DH)                            # (NH*N,DH)

        # output projection: per-head (8-row-aligned) sublane slices + accumulate
        attn = vecs_ref[l * 6 + 0]                                  # bo (1,H)
        for hd in range(NUM_HEADS):
            c_h = ctx2d[hd * N:(hd + 1) * N, :].astype(jnp.bfloat16)
            attn = attn + jnp.dot(c_h, wo_ref[l * NUM_HEADS + hd],
                                  preferred_element_type=jnp.float32)

        h1 = _layernorm(x + attn, vecs_ref[l * 6 + 1], vecs_ref[l * 6 + 2])

        ff = jnp.dot(h1.astype(jnp.bfloat16), w1_ref[l],
                     preferred_element_type=jnp.float32) + b1_ref[l]
        ff = _gelu(ff)
        ff = jnp.dot(ff.astype(jnp.bfloat16), w2_ref[l],
                     preferred_element_type=jnp.float32) + vecs_ref[l * 6 + 3]
        x = _layernorm(h1 + ff, vecs_ref[l * 6 + 4], vecs_ref[l * 6 + 5])

    # ---- CLS head ----
    cls = x.reshape(B, S, H)[:, 0, :]                               # (B,H)
    z = (jnp.sum(cls * cls_ref[0:1, :], axis=-1, keepdims=True)
         + cls_ref[1:2, 0:1])                                       # (B,1)
    return z


def _kernel_infer(*refs):
    *in_refs, logits_ref = refs
    logits_ref[...] = _encoder_cls_logits(*in_refs).astype(logits_ref.dtype)


def _kernel_train(*refs):
    *in_refs, y_ref, logits_ref, loss_ref = refs
    z = _encoder_cls_logits(*in_refs)
    logits_ref[...] = z.astype(logits_ref.dtype)
    y = y_ref[...]                                                  # (B,1)
    # numerically-stable BCEWithLogits: max(z,0) - z*y + log1p(exp(-|z|)), mean
    per = jnp.maximum(z, 0.0) - z * y + jnp.log1p(jnp.exp(-jnp.abs(z)))
    loss_ref[...] = jnp.mean(per, axis=(0, 1), keepdims=True).astype(loss_ref.dtype)


# ---------------- wrapper: one pallas_call for the whole forward -------------
def _full_spec(a):
    nd = a.ndim
    return pl.BlockSpec(a.shape, lambda i, _nd=nd: (0,) * _nd)


def pretrained_transformer_cls_forward(params, input_ids, segment_ids, masks, y=None):
    B, S = input_ids.shape
    N = B * S
    # metadata-only reshapes/casts of tiny int inputs (no gather ops here)
    ids_col = input_ids.reshape(N, 1).astype(jnp.int32)
    segs_col = segment_ids.reshape(N, 1).astype(jnp.int32)
    masks_i = masks.astype(jnp.int32)

    ins = [ids_col, segs_col, masks_i,
           params['word_emb'], params['aux_emb'],
           params['wqkv_h'], params['bqkv_h'], params['wo_h'],
           params['vecs'], params['w1'], params['b1'], params['w2'],
           params['cls_pack']]

    # TODO(synk): at real batch sizes, add a leading "parallel" batch grid axis
    # so v7x's second TensorCore is used (neutral on single-TC v5e/v6e).
    cparams = pltpu.CompilerParams(dimension_semantics=("arbitrary",))

    if y is None:
        logits = pl.pallas_call(
            _kernel_infer,
            out_shape=jax.ShapeDtypeStruct((B, 1), jnp.float32),
            grid=(1,),
            in_specs=[_full_spec(a) for a in ins],
            out_specs=pl.BlockSpec((B, 1), lambda i: (0, 0)),
            compiler_params=cparams,
        )(*ins)
        return logits

    y_in = y.reshape(B, 1).astype(jnp.float32)
    ins2 = ins + [y_in]
    logits, loss = pl.pallas_call(
        _kernel_train,
        out_shape=(jax.ShapeDtypeStruct((B, 1), jnp.float32),
                   jax.ShapeDtypeStruct((1, 1), jnp.float32)),
        grid=(1,),
        in_specs=[_full_spec(a) for a in ins2],
        out_specs=(pl.BlockSpec((B, 1), lambda i: (0, 0)),
                   pl.BlockSpec((1, 1), lambda i: (0, 0))),
        compiler_params=cparams,
    )(*ins2)
    return logits, loss[0, 0]


# ---------------- parameter init (deterministic, synthetic, packed) ----------
def init_params(key):
    keys = iter(jax.random.split(key, 64))
    LNH = NUM_LAYERS * NUM_HEADS

    def norm(shape):
        return 0.02 * jax.random.normal(next(keys), shape, jnp.float32)

    # word embedding table, padded to a lane-aligned 128 rows
    word_emb = jnp.zeros((VOCAB_PAD, H), jnp.float32).at[:VOCAB].set(norm((VOCAB, H)))

    # packed aux table: [pos(16) | type(2) | emb_ln_g(1) | emb_ln_b(1)]
    aux_emb = jnp.concatenate([
        norm((MAX_POS, H)),                 # positions
        norm((TYPE_VOCAB, H)),              # token types
        jnp.ones((1, H), jnp.float32),      # embedding LayerNorm gamma
        jnp.zeros((1, H), jnp.float32),     # embedding LayerNorm beta
    ], axis=0)                              # (20, H)

    # per-head QKV weights packed as (3*L*NH, H, DH), bf16
    wq = norm((NUM_LAYERS, NUM_HEADS, H, DH)).reshape(LNH, H, DH)
    wk = norm((NUM_LAYERS, NUM_HEADS, H, DH)).reshape(LNH, H, DH)
    wv = norm((NUM_LAYERS, NUM_HEADS, H, DH)).reshape(LNH, H, DH)
    wqkv_h = jnp.concatenate([wq, wk, wv], axis=0).astype(jnp.bfloat16)
    bqkv_h = jnp.zeros((3 * LNH, 1, DH), jnp.float32)

    # per-head output projection (L*NH, DH, H), bf16
    wo_h = norm((NUM_LAYERS, NUM_HEADS, DH, H)).reshape(LNH, DH, H).astype(jnp.bfloat16)

    # packed per-layer vectors: [bo, ln1_g, ln1_b, b2, ln2_g, ln2_b] per layer
    per_layer = jnp.stack([
        jnp.zeros((H,), jnp.float32),   # bo
        jnp.ones((H,), jnp.float32),    # ln1_g
        jnp.zeros((H,), jnp.float32),   # ln1_b
        jnp.zeros((H,), jnp.float32),   # b2
        jnp.ones((H,), jnp.float32),    # ln2_g
        jnp.zeros((H,), jnp.float32),   # ln2_b
    ], axis=0)                                                   # (6,H)
    vecs = jnp.concatenate([per_layer] * NUM_LAYERS, axis=0).reshape(
        NUM_LAYERS * 6, 1, H)

    params = {
        'word_emb': word_emb,
        'aux_emb': aux_emb,
        'wqkv_h': wqkv_h,
        'bqkv_h': bqkv_h,
        'wo_h': wo_h,
        'vecs': vecs,
        'w1': norm((NUM_LAYERS, H, FFN)).astype(jnp.bfloat16),
        'b1': jnp.zeros((NUM_LAYERS, 1, FFN), jnp.float32),
        'w2': norm((NUM_LAYERS, FFN, H)).astype(jnp.bfloat16),
        # CLS head packed: row0 = weight (H,), row1[0] = bias
        'cls_pack': jnp.concatenate(
            [norm((1, H)), jnp.zeros((1, H), jnp.float32)], axis=0),
    }
    return params


# ---------------- main -------------------------------------------------------
if __name__ == "__main__":
    key = jax.random.PRNGKey(0)
    kp, ki, ky = jax.random.split(key, 3)

    B, S = 2, 8
    params = init_params(kp)

    input_ids = jax.random.randint(ki, (B, S), 0, VOCAB, dtype=jnp.int32)
    segment_ids = jnp.concatenate(
        [jnp.zeros((B, S // 2), jnp.int32), jnp.ones((B, S // 2), jnp.int32)], axis=1)
    masks = jnp.array([[1, 1, 1, 1, 1, 1, 1, 1],
                       [1, 1, 1, 1, 1, 1, 0, 0]], dtype=jnp.int32)
    y = jax.random.bernoulli(ky, 0.5, (B,)).astype(jnp.float32)

    logits, loss = pretrained_transformer_cls_forward(
        params, input_ids, segment_ids, masks, y)
    jax.block_until_ready((logits, loss))

    logits_only = pretrained_transformer_cls_forward(
        params, input_ids, segment_ids, masks)
    jax.block_until_ready(logits_only)

    assert logits.shape == (B, 1) and loss.shape == ()
    assert logits_only.shape == (B, 1)
    print("KERNEL_OK")
</pallas_src>

<mosaic_0001>
module attributes {stable_mosaic.version = 11 : i64} {
  func.func @_kernel_train(%arg0: i32, %arg1: memref<16x1xi32, #tpu.memory_space<vmem>>, %arg2: memref<16x1xi32, #tpu.memory_space<vmem>>, %arg3: memref<2x8xi32, #tpu.memory_space<vmem>>, %arg4: memref<128x32xf32, #tpu.memory_space<vmem>>, %arg5: memref<20x32xf32, #tpu.memory_space<vmem>>, %arg6: memref<12x32x16xbf16, #tpu.memory_space<vmem>>, %arg7: memref<12x1x16xf32, #tpu.memory_space<vmem>>, %arg8: memref<4x16x32xbf16, #tpu.memory_space<vmem>>, %arg9: memref<12x1x32xf32, #tpu.memory_space<vmem>>, %arg10: memref<2x32x64xbf16, #tpu.memory_space<vmem>>, %arg11: memref<2x1x64xf32, #tpu.memory_space<vmem>>, %arg12: memref<2x64x32xbf16, #tpu.memory_space<vmem>>, %arg13: memref<2x32xf32, #tpu.memory_space<vmem>>, %arg14: memref<2x1xf32, #tpu.memory_space<vmem>>, %arg15: memref<2x1xf32, #tpu.memory_space<vmem>>, %arg16: memref<1x1xf32, #tpu.memory_space<vmem>>) attributes {dimension_semantics = [#tpu.dimension_semantics<arbitrary>], iteration_bounds = array<i64: 1>, scalar_prefetch = 0 : i64, scratch_operands = 0 : i64, tpu.core_type = #tpu.core_type<tc>, window_params = [{pipeline_mode = #tpu.pipeline_mode<synchronous>, transform_indices = @transform_0, window_bounds = array<i64: 16, 1>}, {pipeline_mode = #tpu.pipeline_mode<synchronous>, transform_indices = @transform_1, window_bounds = array<i64: 16, 1>}, {pipeline_mode = #tpu.pipeline_mode<synchronous>, transform_indices = @transform_2, window_bounds = array<i64: 2, 8>}, {pipeline_mode = #tpu.pipeline_mode<synchronous>, transform_indices = @transform_3, window_bounds = array<i64: 128, 32>}, {pipeline_mode = #tpu.pipeline_mode<synchronous>, transform_indices = @transform_4, window_bounds = array<i64: 20, 32>}, {pipeline_mode = #tpu.pipeline_mode<synchronous>, transform_indices = @transform_5, window_bounds = array<i64: 12, 32, 16>}, {pipeline_mode = #tpu.pipeline_mode<synchronous>, transform_indices = @transform_6, window_bounds = array<i64: 12, 1, 16>}, {pipeline_mode = #tpu.pipeline_mode<synchronous>, transform_indices = @transform_7, window_bounds = array<i64: 4, 16, 32>}, {pipeline_mode = #tpu.pipeline_mode<synchronous>, transform_indices = @transform_8, window_bounds = array<i64: 12, 1, 32>}, {pipeline_mode = #tpu.pipeline_mode<synchronous>, transform_indices = @transform_9, window_bounds = array<i64: 2, 32, 64>}, {pipeline_mode = #tpu.pipeline_mode<synchronous>, transform_indices = @transform_10, window_bounds = array<i64: 2, 1, 64>}, {pipeline_mode = #tpu.pipeline_mode<synchronous>, transform_indices = @transform_11, window_bounds = array<i64: 2, 64, 32>}, {pipeline_mode = #tpu.pipeline_mode<synchronous>, transform_indices = @transform_12, window_bounds = array<i64: 2, 32>}, {pipeline_mode = #tpu.pipeline_mode<synchronous>, transform_indices = @transform_13, window_bounds = array<i64: 2, 1>}, {pipeline_mode = #tpu.pipeline_mode<synchronous>, transform_indices = @transform_14, window_bounds = array<i64: 2, 1>}, {pipeline_mode = #tpu.pipeline_mode<synchronous>, transform_indices = @transform_15, window_bounds = array<i64: 1, 1>}]} {
    %c0 = arith.constant 0 : index
    %c0_0 = arith.constant 0 : index
    %0 = vector.load %arg1[%c0, %c0_0] : memref<16x1xi32, #tpu.memory_space<vmem>>, vector<16x1xi32>
    %1 = tpu.iota {dimensions = array<i32: 1>} : vector<16x128xi32>
    %2 = vector.broadcast %0 : vector<16x1xi32> to vector<16x128xi32>
    %3 = arith.cmpi eq, %2, %1 : vector<16x128xi32>
    %4 = arith.extui %3 : vector<16x128xi1> to vector<16x128xi32>
    %5 = arith.sitofp %4 : vector<16x128xi32> to vector<16x128xf32>
    %c0_1 = arith.constant 0 : index
    %c0_2 = arith.constant 0 : index
    %6 = vector.load %arg4[%c0_1, %c0_2] : memref<128x32xf32, #tpu.memory_space<vmem>>, vector<128x32xf32>
    %cst = arith.constant dense<0.000000e+00> : vector<16x32xf32>
    %7 = tpu.matmul %5, %6, %cst {dimension_numbers = #tpu.dot_dimension_numbers<[1], [0], [0], [1], [0, 0, 1, 1], [], []>} : vector<16x128xf32>, vector<128x32xf32>, vector<16x32xf32> -> vector<16x32xf32>
    %c0_3 = arith.constant 0 : index
    %c0_4 = arith.constant 0 : index
    %8 = vector.load %arg5[%c0_3, %c0_4] : memref<20x32xf32, #tpu.memory_space<vmem>>, vector<8x32xf32>
    %9 = tpu.concatenate %8, %8 in 0 : vector<8x32xf32>, vector<8x32xf32> -> vector<16x32xf32>
    %c0_5 = arith.constant 0 : index
    %c0_6 = arith.constant 0 : index
    %10 = vector.load %arg2[%c0_5, %c0_6] : memref<16x1xi32, #tpu.memory_space<vmem>>, vector<16x1xi32>
    %11 = arith.sitofp %10 : vector<16x1xi32> to vector<16x1xf32>
    %c16 = arith.constant 16 : index
    %c0_7 = arith.constant 0 : index
    %12 = vector.load %arg5[%c16, %c0_7] : memref<20x32xf32, #tpu.memory_space<vmem>>, vector<1x32xf32>
    %c17 = arith.constant 17 : index
    %c0_8 = arith.constant 0 : index
    %13 = vector.load %arg5[%c17, %c0_8] : memref<20x32xf32, #tpu.memory_space<vmem>>, vector<1x32xf32>
    %14 = arith.subf %13, %12 : vector<1x32xf32>
    %15 = vector.broadcast %11 : vector<16x1xf32> to vector<16x32xf32>
    %16 = vector.broadcast %14 : vector<1x32xf32> to vector<16x32xf32>
    %17 = arith.mulf %15, %16 : vector<16x32xf32>
    %18 = vector.broadcast %12 : vector<1x32xf32> to vector<16x32xf32>
    %19 = arith.addf %18, %17 : vector<16x32xf32>
    %20 = arith.addf %7, %9 : vector<16x32xf32>
    %21 = arith.addf %20, %19 : vector<16x32xf32>
    %c18 = arith.constant 18 : index
    %c0_9 = arith.constant 0 : index
    %22 = vector.load %arg5[%c18, %c0_9] : memref<20x32xf32, #tpu.memory_space<vmem>>, vector<1x32xf32>
    %c19 = arith.constant 19 : index
    %c0_10 = arith.constant 0 : index
    %23 = vector.load %arg5[%c19, %c0_10] : memref<20x32xf32, #tpu.memory_space<vmem>>, vector<1x32xf32>
    %cst_11 = arith.constant dense<0.000000e+00> : vector<16xf32>
    %24 = vector.multi_reduction <add>, %21, %cst_11 [1] : vector<16x32xf32> to vector<16xf32>
    %25 = vector.shape_cast %24 : vector<16xf32> to vector<16x1xf32>
    %cst_12 = arith.constant 3.200000e+01 : f32
    %26 = vector.broadcast %cst_12 : f32 to vector<16x1xf32>
    %27 = arith.divf %25, %26 : vector<16x1xf32>
    %28 = vector.broadcast %27 : vector<16x1xf32> to vector<16x32xf32>
    %29 = arith.subf %21, %28 : vector<16x32xf32>
    %30 = arith.mulf %29, %29 : vector<16x32xf32>
    %cst_13 = arith.constant dense<0.000000e+00> : vector<16xf32>
    %31 = vector.multi_reduction <add>, %30, %cst_13 [1] : vector<16x32xf32> to vector<16xf32>
    %32 = vector.shape_cast %31 : vector<16xf32> to vector<16x1xf32>
    %cst_14 = arith.constant 3.200000e+01 : f32
    %33 = vector.broadcast %cst_14 : f32 to vector<16x1xf32>
    %34 = arith.divf %32, %33 : vector<16x1xf32>
    %cst_15 = arith.constant 9.99999996E-13 : f32
    %35 = vector.broadcast %cst_15 : f32 to vector<16x1xf32>
    %36 = arith.addf %34, %35 : vector<16x1xf32>
    %37 = math.rsqrt %36 : vector<16x1xf32>
    %38 = vector.broadcast %37 : vector<16x1xf32> to vector<16x32xf32>
    %39 = arith.mulf %29, %38 : vector<16x32xf32>
    %40 = vector.broadcast %22 : vector<1x32xf32> to vector<16x32xf32>
    %41 = arith.mulf %39, %40 : vector<16x32xf32>
    %42 = vector.broadcast %23 : vector<1x32xf32> to vector<16x32xf32>
    %43 = arith.addf %41, %42 : vector<16x32xf32>
    %c0_16 = arith.constant 0 : index
    %c0_17 = arith.constant 0 : index
    %44 = vector.load %arg3[%c0_16, %c0_17] : memref<2x8xi32, #tpu.memory_space<vmem>>, vector<2x8xi32>
    %45 = arith.sitofp %44 : vector<2x8xi32> to vector<2x8xf32>
    %46 = tpu.concatenate %45, %45 in 0 : vector<2x8xf32>, vector<2x8xf32> -> vector<4x8xf32>
    %cst_18 = arith.constant 1.000000e+00 : f32
    %47 = vector.broadcast %cst_18 : f32 to vector<4x8xf32>
    %48 = arith.subf %47, %46 : vector<4x8xf32>
    %cst_19 = arith.constant -1.000000e+09 : f32
    %49 = vector.broadcast %cst_19 : f32 to vector<4x8xf32>
    %50 = arith.mulf %48, %49 : vector<4x8xf32>
    %51 = vector.shape_cast %50 : vector<4x8xf32> to vector<4x1x8xf32>
    %52 = arith.truncf %43 : vector<16x32xf32> to vector<16x32xbf16>
    %c0_20 = arith.constant 0 : index
    %c0_21 = arith.constant 0 : index
    %c0_22 = arith.constant 0 : index
    %53 = vector.load %arg6[%c0_20, %c0_21, %c0_22] : memref<12x32x16xbf16, #tpu.memory_space<vmem>>, vector<1x32x16xbf16>
    %54 = vector.shape_cast %53 : vector<1x32x16xbf16> to vector<32x16xbf16>
    %cst_23 = arith.constant dense<0.000000e+00> : vector<16x16xf32>
    %55 = tpu.matmul %52, %54, %cst_23 {dimension_numbers = #tpu.dot_dimension_numbers<[1], [0], [0], [1], [0, 0, 1, 1], [], []>} : vector<16x32xbf16>, vector<32x16xbf16>, vector<16x16xf32> -> vector<16x16xf32>
    %c0_24 = arith.constant 0 : index
    %c0_25 = arith.constant 0 : index
    %c0_26 = arith.constant 0 : index
    %56 = vector.load %arg7[%c0_24, %c0_25, %c0_26] : memref<12x1x16xf32, #tpu.memory_space<vmem>>, vector<1x1x16xf32>
    %57 = vector.shape_cast %56 : vector<1x1x16xf32> to vector<1x16xf32>
    %58 = vector.broadcast %57 : vector<1x16xf32> to vector<16x16xf32>
    %59 = arith.addf %55, %58 : vector<16x16xf32>
    %c1 = arith.constant 1 : index
    %c0_27 = arith.constant 0 : index
    %c0_28 = arith.constant 0 : index
    %60 = vector.load %arg6[%c1, %c0_27, %c0_28] : memref<12x32x16xbf16, #tpu.memory_space<vmem>>, vector<1x32x16xbf16>
    %61 = vector.shape_cast %60 : vector<1x32x16xbf16> to vector<32x16xbf16>
    %cst_29 = arith.constant dense<0.000000e+00> : vector<16x16xf32>
    %62 = tpu.matmul %52, %61, %cst_29 {dimension_numbers = #tpu.dot_dimension_numbers<[1], [0], [0], [1], [0, 0, 1, 1], [], []>} : vector<16x32xbf16>, vector<32x16xbf16>, vector<16x16xf32> -> vector<16x16xf32>
    %c1_30 = arith.constant 1 : index
    %c0_31 = arith.constant 0 : index
    %c0_32 = arith.constant 0 : index
    %63 = vector.load %arg7[%c1_30, %c0_31, %c0_32] : memref<12x1x16xf32, #tpu.memory_space<vmem>>, vector<1x1x16xf32>
    %64 = vector.shape_cast %63 : vector<1x1x16xf32> to vector<1x16xf32>
    %65 = vector.broadcast %64 : vector<1x16xf32> to vector<16x16xf32>
    %66 = arith.addf %62, %65 : vector<16x16xf32>
    %67 = tpu.concatenate %59, %66 in 0 : vector<16x16xf32>, vector<16x16xf32> -> vector<32x16xf32>
    %68 = vector.shape_cast %67 : vector<32x16xf32> to vector<4x8x16xf32>
    %c4 = arith.constant 4 : index
    %c0_33 = arith.constant 0 : index
    %c0_34 = arith.constant 0 : index
    %69 = vector.load %arg6[%c4, %c0_33, %c0_34] : memref<12x32x16xbf16, #tpu.memory_space<vmem>>, vector<1x32x16xbf16>
    %70 = vector.shape_cast %69 : vector<1x32x16xbf16> to vector<32x16xbf16>
    %cst_35 = arith.constant dense<0.000000e+00> : vector<16x16xf32>
    %71 = tpu.matmul %52, %70, %cst_35 {dimension_numbers = #tpu.dot_dimension_numbers<[1], [0], [0], [1], [0, 0, 1, 1], [], []>} : vector<16x32xbf16>, vector<32x16xbf16>, vector<16x16xf32> -> vector<16x16xf32>
    %c4_36 = arith.constant 4 : index
    %c0_37 = arith.constant 0 : index
    %c0_38 = arith.constant 0 : index
    %72 = vector.load %arg7[%c4_36, %c0_37, %c0_38] : memref<12x1x16xf32, #tpu.memory_space<vmem>>, vector<1x1x16xf32>
    %73 = vector.shape_cast %72 : vector<1x1x16xf32> to vector<1x16xf32>
    %74 = vector.broadcast %73 : vector<1x16xf32> to vector<16x16xf32>
    %75 = arith.addf %71, %74 : vector<16x16xf32>
    %c5 = arith.constant 5 : index
    %c0_39 = arith.constant 0 : index
    %c0_40 = arith.constant 0 : index
    %76 = vector.load %arg6[%c5, %c0_39, %c0_40] : memref<12x32x16xbf16, #tpu.memory_space<vmem>>, vector<1x32x16xbf16>
    %77 = vector.shape_cast %76 : vector<1x32x16xbf16> to vector<32x16xbf16>
    %cst_41 = arith.constant dense<0.000000e+00> : vector<16x16xf32>
    %78 = tpu.matmul %52, %77, %cst_41 {dimension_numbers = #tpu.dot_dimension_numbers<[1], [0], [0], [1], [0, 0, 1, 1], [], []>} : vector<16x32xbf16>, vector<32x16xbf16>, vector<16x16xf32> -> vector<16x16xf32>
    %c5_42 = arith.constant 5 : index
    %c0_43 = arith.constant 0 : index
    %c0_44 = arith.constant 0 : index
    %79 = vector.load %arg7[%c5_42, %c0_43, %c0_44] : memref<12x1x16xf32, #tpu.memory_space<vmem>>, vector<1x1x16xf32>
    %80 = vector.shape_cast %79 : vector<1x1x16xf32> to vector<1x16xf32>
    %81 = vector.broadcast %80 : vector<1x16xf32> to vector<16x16xf32>
    %82 = arith.addf %78, %81 : vector<16x16xf32>
    %83 = tpu.concatenate %75, %82 in 0 : vector<16x16xf32>, vector<16x16xf32> -> vector<32x16xf32>
    %84 = vector.shape_cast %83 : vector<32x16xf32> to vector<4x8x16xf32>
    %c8 = arith.constant 8 : index
    %c0_45 = arith.constant 0 : index
    %c0_46 = arith.constant 0 : index
    %85 = vector.load %arg6[%c8, %c0_45, %c0_46] : memref<12x32x16xbf16, #tpu.memory_space<vmem>>, vector<1x32x16xbf16>
    %86 = vector.shape_cast %85 : vector<1x32x16xbf16> to vector<32x16xbf16>
    %cst_47 = arith.constant dense<0.000000e+00> : vector<16x16xf32>
    %87 = tpu.matmul %52, %86, %cst_47 {dimension_numbers = #tpu.dot_dimension_numbers<[1], [0], [0], [1], [0, 0, 1, 1], [], []>} : vector<16x32xbf16>, vector<32x16xbf16>, vector<16x16xf32> -> vector<16x16xf32>
    %c8_48 = arith.constant 8 : index
    %c0_49 = arith.constant 0 : index
    %c0_50 = arith.constant 0 : index
    %88 = vector.load %arg7[%c8_48, %c0_49, %c0_50] : memref<12x1x16xf32, #tpu.memory_space<vmem>>, vector<1x1x16xf32>
    %89 = vector.shape_cast %88 : vector<1x1x16xf32> to vector<1x16xf32>
    %90 = vector.broadcast %89 : vector<1x16xf32> to vector<16x16xf32>
    %91 = arith.addf %87, %90 : vector<16x16xf32>
    %c9 = arith.constant 9 : index
    %c0_51 = arith.constant 0 : index
    %c0_52 = arith.constant 0 : index
    %92 = vector.load %arg6[%c9, %c0_51, %c0_52] : memref<12x32x16xbf16, #tpu.memory_space<vmem>>, vector<1x32x16xbf16>
    %93 = vector.shape_cast %92 : vector<1x32x16xbf16> to vector<32x16xbf16>
    %cst_53 = arith.constant dense<0.000000e+00> : vector<16x16xf32>
    %94 = tpu.matmul %52, %93, %cst_53 {dimension_numbers = #tpu.dot_dimension_numbers<[1], [0], [0], [1], [0, 0, 1, 1], [], []>} : vector<16x32xbf16>, vector<32x16xbf16>, vector<16x16xf32> -> vector<16x16xf32>
    %c9_54 = arith.constant 9 : index
    %c0_55 = arith.constant 0 : index
    %c0_56 = arith.constant 0 : index
    %95 = vector.load %arg7[%c9_54, %c0_55, %c0_56] : memref<12x1x16xf32, #tpu.memory_space<vmem>>, vector<1x1x16xf32>
    %96 = vector.shape_cast %95 : vector<1x1x16xf32> to vector<1x16xf32>
    %97 = vector.broadcast %96 : vector<1x16xf32> to vector<16x16xf32>
    %98 = arith.addf %94, %97 : vector<16x16xf32>
    %99 = tpu.concatenate %91, %98 in 0 : vector<16x16xf32>, vector<16x16xf32> -> vector<32x16xf32>
    %100 = vector.shape_cast %99 : vector<32x16xf32> to vector<4x8x16xf32>
    "tpu.trace_start"() <{level = 10 : i32, message = "bqd,bkd->bqk"}> : () -> ()
    %cst_57 = arith.constant dense<0.000000e+00> : vector<4x8x8xf32>
    %101 = tpu.matmul %68, %84, %cst_57 {dimension_numbers = #tpu.dot_dimension_numbers<[2], [2], [1], [1], [0, 0, 0, 1, 1, 1], [0], [0]>} : vector<4x8x16xf32>, vector<4x8x16xf32>, vector<4x8x8xf32> -> vector<4x8x8xf32>
    "tpu.trace_stop"() : () -> ()
    %cst_58 = arith.constant 2.500000e-01 : f32
    %102 = vector.broadcast %cst_58 : f32 to vector<4x8x8xf32>
    %103 = arith.mulf %101, %102 : vector<4x8x8xf32>
    %104 = vector.broadcast %51 : vector<4x1x8xf32> to vector<4x8x8xf32>
    %105 = arith.addf %103, %104 : vector<4x8x8xf32>
    %cst_59 = arith.constant dense<0xFF800000> : vector<4x8xf32>
    %106 = vector.multi_reduction <maximumf>, %105, %cst_59 [2] : vector<4x8x8xf32> to vector<4x8xf32>
    %107 = vector.shape_cast %106 : vector<4x8xf32> to vector<4x8x1xf32>
    %108 = vector.broadcast %107 : vector<4x8x1xf32> to vector<4x8x8xf32>
    %109 = arith.subf %105, %108 : vector<4x8x8xf32>
    %110 = math.exp %109 : vector<4x8x8xf32>
    %cst_60 = arith.constant dense<0.000000e+00> : vector<4x8xf32>
    %111 = vector.multi_reduction <add>, %110, %cst_60 [2] : vector<4x8x8xf32> to vector<4x8xf32>
    %112 = vector.shape_cast %111 : vector<4x8xf32> to vector<4x8x1xf32>
    %113 = tpu.reciprocal %112 {approx = true} : vector<4x8x1xf32> -> vector<4x8x1xf32>
    %114 = vector.broadcast %113 : vector<4x8x1xf32> to vector<4x8x8xf32>
    %115 = arith.mulf %110, %114 : vector<4x8x8xf32>
    "tpu.trace_start"() <{level = 10 : i32, message = "bqk,bkd->bqd"}> : () -> ()
    %cst_61 = arith.constant dense<0.000000e+00> : vector<4x8x16xf32>
    %116 = tpu.matmul %115, %100, %cst_61 {dimension_numbers = #tpu.dot_dimension_numbers<[2], [1], [1], [2], [0, 0, 0, 1, 1, 2], [0], [0]>} : vector<4x8x8xf32>, vector<4x8x16xf32>, vector<4x8x16xf32> -> vector<4x8x16xf32>
    "tpu.trace_stop"() : () -> ()
    %117 = vector.shape_cast %116 : vector<4x8x16xf32> to vector<32x16xf32>
    %c0_62 = arith.constant 0 : index
    %c0_63 = arith.constant 0 : index
    %c0_64 = arith.constant 0 : index
    %118 = vector.load %arg9[%c0_62, %c0_63, %c0_64] : memref<12x1x32xf32, #tpu.memory_space<vmem>>, vector<1x1x32xf32>
    %119 = vector.shape_cast %118 : vector<1x1x32xf32> to vector<1x32xf32>
    %120 = vector.extract_strided_slice %117 {offsets = [0, 0], sizes = [16, 16], strides = [1, 1]} : vector<32x16xf32> to vector<16x16xf32>
    %121 = arith.truncf %120 : vector<16x16xf32> to vector<16x16xbf16>
    %c0_65 = arith.constant 0 : index
    %c0_66 = arith.constant 0 : index
    %c0_67 = arith.constant 0 : index
    %122 = vector.load %arg8[%c0_65, %c0_66, %c0_67] : memref<4x16x32xbf16, #tpu.memory_space<vmem>>, vector<1x16x32xbf16>
    %123 = vector.shape_cast %122 : vector<1x16x32xbf16> to vector<16x32xbf16>
    %cst_68 = arith.constant dense<0.000000e+00> : vector<16x32xf32>
    %124 = tpu.matmul %121, %123, %cst_68 {dimension_numbers = #tpu.dot_dimension_numbers<[1], [0], [0], [1], [0, 0, 1, 1], [], []>} : vector<16x16xbf16>, vector<16x32xbf16>, vector<16x32xf32> -> vector<16x32xf32>
    %125 = vector.broadcast %119 : vector<1x32xf32> to vector<16x32xf32>
    %126 = arith.addf %125, %124 : vector<16x32xf32>
    %127 = vector.extract_strided_slice %117 {offsets = [16, 0], sizes = [16, 16], strides = [1, 1]} : vector<32x16xf32> to vector<16x16xf32>
    %128 = arith.truncf %127 : vector<16x16xf32> to vector<16x16xbf16>
    %c1_69 = arith.constant 1 : index
    %c0_70 = arith.constant 0 : index
    %c0_71 = arith.constant 0 : index
    %129 = vector.load %arg8[%c1_69, %c0_70, %c0_71] : memref<4x16x32xbf16, #tpu.memory_space<vmem>>, vector<1x16x32xbf16>
    %130 = vector.shape_cast %129 : vector<1x16x32xbf16> to vector<16x32xbf16>
    %cst_72 = arith.constant dense<0.000000e+00> : vector<16x32xf32>
    %131 = tpu.matmul %128, %130, %cst_72 {dimension_numbers = #tpu.dot_dimension_numbers<[1], [0], [0], [1], [0, 0, 1, 1], [], []>} : vector<16x16xbf16>, vector<16x32xbf16>, vector<16x32xf32> -> vector<16x32xf32>
    %132 = arith.addf %126, %131 : vector<16x32xf32>
    %133 = arith.addf %43, %132 : vector<16x32xf32>
    %c1_73 = arith.constant 1 : index
    %c0_74 = arith.constant 0 : index
    %c0_75 = arith.constant 0 : index
    %134 = vector.load %arg9[%c1_73, %c0_74, %c0_75] : memref<12x1x32xf32, #tpu.memory_space<vmem>>, vector<1x1x32xf32>
    %135 = vector.shape_cast %134 : vector<1x1x32xf32> to vector<1x32xf32>
    %c2 = arith.constant 2 : index
    %c0_76 = arith.constant 0 : index
    %c0_77 = arith.constant 0 : index
    %136 = vector.load %arg9[%c2, %c0_76, %c0_77] : memref<12x1x32xf32, #tpu.memory_space<vmem>>, vector<1x1x32xf32>
    %137 = vector.shape_cast %136 : vector<1x1x32xf32> to vector<1x32xf32>
    %cst_78 = arith.constant dense<0.000000e+00> : vector<16xf32>
    %138 = vector.multi_reduction <add>, %133, %cst_78 [1] : vector<16x32xf32> to vector<16xf32>
    %139 = vector.shape_cast %138 : vector<16xf32> to vector<16x1xf32>
    %cst_79 = arith.constant 3.200000e+01 : f32
    %140 = vector.broadcast %cst_79 : f32 to vector<16x1xf32>
    %141 = arith.divf %139, %140 : vector<16x1xf32>
    %142 = vector.broadcast %141 : vector<16x1xf32> to vector<16x32xf32>
    %143 = arith.subf %133, %142 : vector<16x32xf32>
    %144 = arith.mulf %143, %143 : vector<16x32xf32>
    %cst_80 = arith.constant dense<0.000000e+00> : vector<16xf32>
    %145 = vector.multi_reduction <add>, %144, %cst_80 [1] : vector<16x32xf32> to vector<16xf32>
    %146 = vector.shape_cast %145 : vector<16xf32> to vector<16x1xf32>
    %cst_81 = arith.constant 3.200000e+01 : f32
    %147 = vector.broadcast %cst_81 : f32 to vector<16x1xf32>
    %148 = arith.divf %146, %147 : vector<16x1xf32>
    %cst_82 = arith.constant 9.99999996E-13 : f32
    %149 = vector.broadcast %cst_82 : f32 to vector<16x1xf32>
    %150 = arith.addf %148, %149 : vector<16x1xf32>
    %151 = math.rsqrt %150 : vector<16x1xf32>
    %152 = vector.broadcast %151 : vector<16x1xf32> to vector<16x32xf32>
    %153 = arith.mulf %143, %152 : vector<16x32xf32>
    %154 = vector.broadcast %135 : vector<1x32xf32> to vector<16x32xf32>
    %155 = arith.mulf %153, %154 : vector<16x32xf32>
    %156 = vector.broadcast %137 : vector<1x32xf32> to vector<16x32xf32>
    %157 = arith.addf %155, %156 : vector<16x32xf32>
    %158 = arith.truncf %157 : vector<16x32xf32> to vector<16x32xbf16>
    %c0_83 = arith.constant 0 : index
    %c0_84 = arith.constant 0 : index
    %c0_85 = arith.constant 0 : index
    %159 = vector.load %arg10[%c0_83, %c0_84, %c0_85] : memref<2x32x64xbf16, #tpu.memory_space<vmem>>, vector<1x32x64xbf16>
    %160 = vector.shape_cast %159 : vector<1x32x64xbf16> to vector<32x64xbf16>
    %cst_86 = arith.constant dense<0.000000e+00> : vector<16x64xf32>
    %161 = tpu.matmul %158, %160, %cst_86 {dimension_numbers = #tpu.dot_dimension_numbers<[1], [0], [0], [1], [0, 0, 1, 1], [], []>} : vector<16x32xbf16>, vector<32x64xbf16>, vector<16x64xf32> -> vector<16x64xf32>
    %c0_87 = arith.constant 0 : index
    %c0_88 = arith.constant 0 : index
    %c0_89 = arith.constant 0 : index
    %162 = vector.load %arg11[%c0_87, %c0_88, %c0_89] : memref<2x1x64xf32, #tpu.memory_space<vmem>>, vector<1x1x64xf32>
    %163 = vector.shape_cast %162 : vector<1x1x64xf32> to vector<1x64xf32>
    %164 = vector.broadcast %163 : vector<1x64xf32> to vector<16x64xf32>
    %165 = arith.addf %161, %164 : vector<16x64xf32>
    %cst_90 = arith.constant 5.000000e-01 : f32
    %166 = vector.broadcast %cst_90 : f32 to vector<16x64xf32>
    %167 = arith.mulf %166, %165 : vector<16x64xf32>
    %cst_91 = arith.constant 4.471500e-02 : f32
    %168 = vector.broadcast %cst_91 : f32 to vector<16x64xf32>
    %169 = arith.mulf %168, %165 : vector<16x64xf32>
    %170 = arith.mulf %169, %165 : vector<16x64xf32>
    %171 = arith.mulf %170, %165 : vector<16x64xf32>
    %172 = arith.addf %165, %171 : vector<16x64xf32>
    %cst_92 = arith.constant 0.797884583 : f32
    %173 = vector.broadcast %cst_92 : f32 to vector<16x64xf32>
    %174 = arith.mulf %173, %172 : vector<16x64xf32>
    %175 = math.tanh %174 : vector<16x64xf32>
    %cst_93 = arith.constant 1.000000e+00 : f32
    %176 = vector.broadcast %cst_93 : f32 to vector<16x64xf32>
    %177 = arith.addf %176, %175 : vector<16x64xf32>
    %178 = arith.mulf %167, %177 : vector<16x64xf32>
    %179 = arith.truncf %178 : vector<16x64xf32> to vector<16x64xbf16>
    %c0_94 = arith.constant 0 : index
    %c0_95 = arith.constant 0 : index
    %c0_96 = arith.constant 0 : index
    %180 = vector.load %arg12[%c0_94, %c0_95, %c0_96] : memref<2x64x32xbf16, #tpu.memory_space<vmem>>, vector<1x64x32xbf16>
    %181 = vector.shape_cast %180 : vector<1x64x32xbf16> to vector<64x32xbf16>
    %cst_97 = arith.constant dense<0.000000e+00> : vector<16x32xf32>
    %182 = tpu.matmul %179, %181, %cst_97 {dimension_numbers = #tpu.dot_dimension_numbers<[1], [0], [0], [1], [0, 0, 1, 1], [], []>} : vector<16x64xbf16>, vector<64x32xbf16>, vector<16x32xf32> -> vector<16x32xf32>
    %c3 = arith.constant 3 : index
    %c0_98 = arith.constant 0 : index
    %c0_99 = arith.constant 0 : index
    %183 = vector.load %arg9[%c3, %c0_98, %c0_99] : memref<12x1x32xf32, #tpu.memory_space<vmem>>, vector<1x1x32xf32>
    %184 = vector.shape_cast %183 : vector<1x1x32xf32> to vector<1x32xf32>
    %185 = vector.broadcast %184 : vector<1x32xf32> to vector<16x32xf32>
    %186 = arith.addf %182, %185 : vector<16x32xf32>
    %187 = arith.addf %157, %186 : vector<16x32xf32>
    %c4_100 = arith.constant 4 : index
    %c0_101 = arith.constant 0 : index
    %c0_102 = arith.constant 0 : index
    %188 = vector.load %arg9[%c4_100, %c0_101, %c0_102] : memref<12x1x32xf32, #tpu.memory_space<vmem>>, vector<1x1x32xf32>
    %189 = vector.shape_cast %188 : vector<1x1x32xf32> to vector<1x32xf32>
    %c5_103 = arith.constant 5 : index
    %c0_104 = arith.constant 0 : index
    %c0_105 = arith.constant 0 : index
    %190 = vector.load %arg9[%c5_103, %c0_104, %c0_105] : memref<12x1x32xf32, #tpu.memory_space<vmem>>, vector<1x1x32xf32>
    %191 = vector.shape_cast %190 : vector<1x1x32xf32> to vector<1x32xf32>
    %cst_106 = arith.constant dense<0.000000e+00> : vector<16xf32>
    %192 = vector.multi_reduction <add>, %187, %cst_106 [1] : vector<16x32xf32> to vector<16xf32>
    %193 = vector.shape_cast %192 : vector<16xf32> to vector<16x1xf32>
    %cst_107 = arith.constant 3.200000e+01 : f32
    %194 = vector.broadcast %cst_107 : f32 to vector<16x1xf32>
    %195 = arith.divf %193, %194 : vector<16x1xf32>
    %196 = vector.broadcast %195 : vector<16x1xf32> to vector<16x32xf32>
    %197 = arith.subf %187, %196 : vector<16x32xf32>
    %198 = arith.mulf %197, %197 : vector<16x32xf32>
    %cst_108 = arith.constant dense<0.000000e+00> : vector<16xf32>
    %199 = vector.multi_reduction <add>, %198, %cst_108 [1] : vector<16x32xf32> to vector<16xf32>
    %200 = vector.shape_cast %199 : vector<16xf32> to vector<16x1xf32>
    %cst_109 = arith.constant 3.200000e+01 : f32
    %201 = vector.broadcast %cst_109 : f32 to vector<16x1xf32>
    %202 = arith.divf %200, %201 : vector<16x1xf32>
    %cst_110 = arith.constant 9.99999996E-13 : f32
    %203 = vector.broadcast %cst_110 : f32 to vector<16x1xf32>
    %204 = arith.addf %202, %203 : vector<16x1xf32>
    %205 = math.rsqrt %204 : vector<16x1xf32>
    %206 = vector.broadcast %205 : vector<16x1xf32> to vector<16x32xf32>
    %207 = arith.mulf %197, %206 : vector<16x32xf32>
    %208 = vector.broadcast %189 : vector<1x32xf32> to vector<16x32xf32>
    %209 = arith.mulf %207, %208 : vector<16x32xf32>
    %210 = vector.broadcast %191 : vector<1x32xf32> to vector<16x32xf32>
    %211 = arith.addf %209, %210 : vector<16x32xf32>
    %212 = arith.truncf %211 : vector<16x32xf32> to vector<16x32xbf16>
    %c2_111 = arith.constant 2 : index
    %c0_112 = arith.constant 0 : index
    %c0_113 = arith.constant 0 : index
    %213 = vector.load %arg6[%c2_111, %c0_112, %c0_113] : memref<12x32x16xbf16, #tpu.memory_space<vmem>>, vector<1x32x16xbf16>
    %214 = vector.shape_cast %213 : vector<1x32x16xbf16> to vector<32x16xbf16>
    %cst_114 = arith.constant dense<0.000000e+00> : vector<16x16xf32>
    %215 = tpu.matmul %212, %214, %cst_114 {dimension_numbers = #tpu.dot_dimension_numbers<[1], [0], [0], [1], [0, 0, 1, 1], [], []>} : vector<16x32xbf16>, vector<32x16xbf16>, vector<16x16xf32> -> vector<16x16xf32>
    %c2_115 = arith.constant 2 : index
    %c0_116 = arith.constant 0 : index
    %c0_117 = arith.constant 0 : index
    %216 = vector.load %arg7[%c2_115, %c0_116, %c0_117] : memref<12x1x16xf32, #tpu.memory_space<vmem>>, vector<1x1x16xf32>
    %217 = vector.shape_cast %216 : vector<1x1x16xf32> to vector<1x16xf32>
    %218 = vector.broadcast %217 : vector<1x16xf32> to vector<16x16xf32>
    %219 = arith.addf %215, %218 : vector<16x16xf32>
    %c3_118 = arith.constant 3 : index
    %c0_119 = arith.constant 0 : index
    %c0_120 = arith.constant 0 : index
    %220 = vector.load %arg6[%c3_118, %c0_119, %c0_120] : memref<12x32x16xbf16, #tpu.memory_space<vmem>>, vector<1x32x16xbf16>
    %221 = vector.shape_cast %220 : vector<1x32x16xbf16> to vector<32x16xbf16>
    %cst_121 = arith.constant dense<0.000000e+00> : vector<16x16xf32>
    %222 = tpu.matmul %212, %221, %cst_121 {dimension_numbers = #tpu.dot_dimension_numbers<[1], [0], [0], [1], [0, 0, 1, 1], [], []>} : vector<16x32xbf16>, vector<32x16xbf16>, vector<16x16xf32> -> vector<16x16xf32>
    %c3_122 = arith.constant 3 : index
    %c0_123 = arith.constant 0 : index
    %c0_124 = arith.constant 0 : index
    %223 = vector.load %arg7[%c3_122, %c0_123, %c0_124] : memref<12x1x16xf32, #tpu.memory_space<vmem>>, vector<1x1x16xf32>
    %224 = vector.shape_cast %223 : vector<1x1x16xf32> to vector<1x16xf32>
    %225 = vector.broadcast %224 : vector<1x16xf32> to vector<16x16xf32>
    %226 = arith.addf %222, %225 : vector<16x16xf32>
    %227 = tpu.concatenate %219, %226 in 0 : vector<16x16xf32>, vector<16x16xf32> -> vector<32x16xf32>
    %228 = vector.shape_cast %227 : vector<32x16xf32> to vector<4x8x16xf32>
    %c6 = arith.constant 6 : index
    %c0_125 = arith.constant 0 : index
    %c0_126 = arith.constant 0 : index
    %229 = vector.load %arg6[%c6, %c0_125, %c0_126] : memref<12x32x16xbf16, #tpu.memory_space<vmem>>, vector<1x32x16xbf16>
    %230 = vector.shape_cast %229 : vector<1x32x16xbf16> to vector<32x16xbf16>
    %cst_127 = arith.constant dense<0.000000e+00> : vector<16x16xf32>
    %231 = tpu.matmul %212, %230, %cst_127 {dimension_numbers = #tpu.dot_dimension_numbers<[1], [0], [0], [1], [0, 0, 1, 1], [], []>} : vector<16x32xbf16>, vector<32x16xbf16>, vector<16x16xf32> -> vector<16x16xf32>
    %c6_128 = arith.constant 6 : index
    %c0_129 = arith.constant 0 : index
    %c0_130 = arith.constant 0 : index
    %232 = vector.load %arg7[%c6_128, %c0_129, %c0_130] : memref<12x1x16xf32, #tpu.memory_space<vmem>>, vector<1x1x16xf32>
    %233 = vector.shape_cast %232 : vector<1x1x16xf32> to vector<1x16xf32>
    %234 = vector.broadcast %233 : vector<1x16xf32> to vector<16x16xf32>
    %235 = arith.addf %231, %234 : vector<16x16xf32>
    %c7 = arith.constant 7 : index
    %c0_131 = arith.constant 0 : index
    %c0_132 = arith.constant 0 : index
    %236 = vector.load %arg6[%c7, %c0_131, %c0_132] : memref<12x32x16xbf16, #tpu.memory_space<vmem>>, vector<1x32x16xbf16>
    %237 = vector.shape_cast %236 : vector<1x32x16xbf16> to vector<32x16xbf16>
    %cst_133 = arith.constant dense<0.000000e+00> : vector<16x16xf32>
    %238 = tpu.matmul %212, %237, %cst_133 {dimension_numbers = #tpu.dot_dimension_numbers<[1], [0], [0], [1], [0, 0, 1, 1], [], []>} : vector<16x32xbf16>, vector<32x16xbf16>, vector<16x16xf32> -> vector<16x16xf32>
    %c7_134 = arith.constant 7 : index
    %c0_135 = arith.constant 0 : index
    %c0_136 = arith.constant 0 : index
    %239 = vector.load %arg7[%c7_134, %c0_135, %c0_136] : memref<12x1x16xf32, #tpu.memory_space<vmem>>, vector<1x1x16xf32>
    %240 = vector.shape_cast %239 : vector<1x1x16xf32> to vector<1x16xf32>
    %241 = vector.broadcast %240 : vector<1x16xf32> to vector<16x16xf32>
    %242 = arith.addf %238, %241 : vector<16x16xf32>
    %243 = tpu.concatenate %235, %242 in 0 : vector<16x16xf32>, vector<16x16xf32> -> vector<32x16xf32>
    %244 = vector.shape_cast %243 : vector<32x16xf32> to vector<4x8x16xf32>
    %c10 = arith.constant 10 : index
    %c0_137 = arith.constant 0 : index
    %c0_138 = arith.constant 0 : index
    %245 = vector.load %arg6[%c10, %c0_137, %c0_138] : memref<12x32x16xbf16, #tpu.memory_space<vmem>>, vector<1x32x16xbf16>
    %246 = vector.shape_cast %245 : vector<1x32x16xbf16> to vector<32x16xbf16>
    %cst_139 = arith.constant dense<0.000000e+00> : vector<16x16xf32>
    %247 = tpu.matmul %212, %246, %cst_139 {dimension_numbers = #tpu.dot_dimension_numbers<[1], [0], [0], [1], [0, 0, 1, 1], [], []>} : vector<16x32xbf16>, vector<32x16xbf16>, vector<16x16xf32> -> vector<16x16xf32>
    %c10_140 = arith.constant 10 : index
    %c0_141 = arith.constant 0 : index
    %c0_142 = arith.constant 0 : index
    %248 = vector.load %arg7[%c10_140, %c0_141, %c0_142] : memref<12x1x16xf32, #tpu.memory_space<vmem>>, vector<1x1x16xf32>
    %249 = vector.shape_cast %248 : vector<1x1x16xf32> to vector<1x16xf32>
    %250 = vector.broadcast %249 : vector<1x16xf32> to vector<16x16xf32>
    %251 = arith.addf %247, %250 : vector<16x16xf32>
    %c11 = arith.constant 11 : index
    %c0_143 = arith.constant 0 : index
    %c0_144 = arith.constant 0 : index
    %252 = vector.load %arg6[%c11, %c0_143, %c0_144] : memref<12x32x16xbf16, #tpu.memory_space<vmem>>, vector<1x32x16xbf16>
    %253 = vector.shape_cast %252 : vector<1x32x16xbf16> to vector<32x16xbf16>
    %cst_145 = arith.constant dense<0.000000e+00> : vector<16x16xf32>
    %254 = tpu.matmul %212, %253, %cst_145 {dimension_numbers = #tpu.dot_dimension_numbers<[1], [0], [0], [1], [0, 0, 1, 1], [], []>} : vector<16x32xbf16>, vector<32x16xbf16>, vector<16x16xf32> -> vector<16x16xf32>
    %c11_146 = arith.constant 11 : index
    %c0_147 = arith.constant 0 : index
    %c0_148 = arith.constant 0 : index
    %255 = vector.load %arg7[%c11_146, %c0_147, %c0_148] : memref<12x1x16xf32, #tpu.memory_space<vmem>>, vector<1x1x16xf32>
    %256 = vector.shape_cast %255 : vector<1x1x16xf32> to vector<1x16xf32>
    %257 = vector.broadcast %256 : vector<1x16xf32> to vector<16x16xf32>
    %258 = arith.addf %254, %257 : vector<16x16xf32>
    %259 = tpu.concatenate %251, %258 in 0 : vector<16x16xf32>, vector<16x16xf32> -> vector<32x16xf32>
    %260 = vector.shape_cast %259 : vector<32x16xf32> to vector<4x8x16xf32>
    "tpu.trace_start"() <{level = 10 : i32, message = "bqd,bkd->bqk"}> : () -> ()
    %cst_149 = arith.constant dense<0.000000e+00> : vector<4x8x8xf32>
    %261 = tpu.matmul %228, %244, %cst_149 {dimension_numbers = #tpu.dot_dimension_numbers<[2], [2], [1], [1], [0, 0, 0, 1, 1, 1], [0], [0]>} : vector<4x8x16xf32>, vector<4x8x16xf32>, vector<4x8x8xf32> -> vector<4x8x8xf32>
    "tpu.trace_stop"() : () -> ()
    %cst_150 = arith.constant 2.500000e-01 : f32
    %262 = vector.broadcast %cst_150 : f32 to vector<4x8x8xf32>
    %263 = arith.mulf %261, %262 : vector<4x8x8xf32>
    %264 = vector.broadcast %51 : vector<4x1x8xf32> to vector<4x8x8xf32>
    %265 = arith.addf %263, %264 : vector<4x8x8xf32>
    %cst_151 = arith.constant dense<0xFF800000> : vector<4x8xf32>
    %266 = vector.multi_reduction <maximumf>, %265, %cst_151 [2] : vector<4x8x8xf32> to vector<4x8xf32>
    %267 = vector.shape_cast %266 : vector<4x8xf32> to vector<4x8x1xf32>
    %268 = vector.broadcast %267 : vector<4x8x1xf32> to vector<4x8x8xf32>
    %269 = arith.subf %265, %268 : vector<4x8x8xf32>
    %270 = math.exp %269 : vector<4x8x8xf32>
    %cst_152 = arith.constant dense<0.000000e+00> : vector<4x8xf32>
    %271 = vector.multi_reduction <add>, %270, %cst_152 [2] : vector<4x8x8xf32> to vector<4x8xf32>
    %272 = vector.shape_cast %271 : vector<4x8xf32> to vector<4x8x1xf32>
    %273 = tpu.reciprocal %272 {approx = true} : vector<4x8x1xf32> -> vector<4x8x1xf32>
    %274 = vector.broadcast %273 : vector<4x8x1xf32> to vector<4x8x8xf32>
    %275 = arith.mulf %270, %274 : vector<4x8x8xf32>
    "tpu.trace_start"() <{level = 10 : i32, message = "bqk,bkd->bqd"}> : () -> ()
    %cst_153 = arith.constant dense<0.000000e+00> : vector<4x8x16xf32>
    %276 = tpu.matmul %275, %260, %cst_153 {dimension_numbers = #tpu.dot_dimension_numbers<[2], [1], [1], [2], [0, 0, 0, 1, 1, 2], [0], [0]>} : vector<4x8x8xf32>, vector<4x8x16xf32>, vector<4x8x16xf32> -> vector<4x8x16xf32>
    "tpu.trace_stop"() : () -> ()
    %277 = vector.shape_cast %276 : vector<4x8x16xf32> to vector<32x16xf32>
    %c6_154 = arith.constant 6 : index
    %c0_155 = arith.constant 0 : index
    %c0_156 = arith.constant 0 : index
    %278 = vector.load %arg9[%c6_154, %c0_155, %c0_156] : memref<12x1x32xf32, #tpu.memory_space<vmem>>, vector<1x1x32xf32>
    %279 = vector.shape_cast %278 : vector<1x1x32xf32> to vector<1x32xf32>
    %280 = vector.extract_strided_slice %277 {offsets = [0, 0], sizes = [16, 16], strides = [1, 1]} : vector<32x16xf32> to vector<16x16xf32>
    %281 = arith.truncf %280 : vector<16x16xf32> to vector<16x16xbf16>
    %c2_157 = arith.constant 2 : index
    %c0_158 = arith.constant 0 : index
    %c0_159 = arith.constant 0 : index
    %282 = vector.load %arg8[%c2_157, %c0_158, %c0_159] : memref<4x16x32xbf16, #tpu.memory_space<vmem>>, vector<1x16x32xbf16>
    %283 = vector.shape_cast %282 : vector<1x16x32xbf16> to vector<16x32xbf16>
    %cst_160 = arith.constant dense<0.000000e+00> : vector<16x32xf32>
    %284 = tpu.matmul %281, %283, %cst_160 {dimension_numbers = #tpu.dot_dimension_numbers<[1], [0], [0], [1], [0, 0, 1, 1], [], []>} : vector<16x16xbf16>, vector<16x32xbf16>, vector<16x32xf32> -> vector<16x32xf32>
    %285 = vector.broadcast %279 : vector<1x32xf32> to vector<16x32xf32>
    %286 = arith.addf %285, %284 : vector<16x32xf32>
    %287 = vector.extract_strided_slice %277 {offsets = [16, 0], sizes = [16, 16], strides = [1, 1]} : vector<32x16xf32> to vector<16x16xf32>
    %288 = arith.truncf %287 : vector<16x16xf32> to vector<16x16xbf16>
    %c3_161 = arith.constant 3 : index
    %c0_162 = arith.constant 0 : index
    %c0_163 = arith.constant 0 : index
    %289 = vector.load %arg8[%c3_161, %c0_162, %c0_163] : memref<4x16x32xbf16, #tpu.memory_space<vmem>>, vector<1x16x32xbf16>
    %290 = vector.shape_cast %289 : vector<1x16x32xbf16> to vector<16x32xbf16>
    %cst_164 = arith.constant dense<0.000000e+00> : vector<16x32xf32>
    %291 = tpu.matmul %288, %290, %cst_164 {dimension_numbers = #tpu.dot_dimension_numbers<[1], [0], [0], [1], [0, 0, 1, 1], [], []>} : vector<16x16xbf16>, vector<16x32xbf16>, vector<16x32xf32> -> vector<16x32xf32>
    %292 = arith.addf %286, %291 : vector<16x32xf32>
    %293 = arith.addf %211, %292 : vector<16x32xf32>
    %c7_165 = arith.constant 7 : index
    %c0_166 = arith.constant 0 : index
    %c0_167 = arith.constant 0 : index
    %294 = vector.load %arg9[%c7_165, %c0_166, %c0_167] : memref<12x1x32xf32, #tpu.memory_space<vmem>>, vector<1x1x32xf32>
    %295 = vector.shape_cast %294 : vector<1x1x32xf32> to vector<1x32xf32>
    %c8_168 = arith.constant 8 : index
    %c0_169 = arith.constant 0 : index
    %c0_170 = arith.constant 0 : index
    %296 = vector.load %arg9[%c8_168, %c0_169, %c0_170] : memref<12x1x32xf32, #tpu.memory_space<vmem>>, vector<1x1x32xf32>
    %297 = vector.shape_cast %296 : vector<1x1x32xf32> to vector<1x32xf32>
    %cst_171 = arith.constant dense<0.000000e+00> : vector<16xf32>
    %298 = vector.multi_reduction <add>, %293, %cst_171 [1] : vector<16x32xf32> to vector<16xf32>
    %299 = vector.shape_cast %298 : vector<16xf32> to vector<16x1xf32>
    %cst_172 = arith.constant 3.200000e+01 : f32
    %300 = vector.broadcast %cst_172 : f32 to vector<16x1xf32>
    %301 = arith.divf %299, %300 : vector<16x1xf32>
    %302 = vector.broadcast %301 : vector<16x1xf32> to vector<16x32xf32>
    %303 = arith.subf %293, %302 : vector<16x32xf32>
    %304 = arith.mulf %303, %303 : vector<16x32xf32>
    %cst_173 = arith.constant dense<0.000000e+00> : vector<16xf32>
    %305 = vector.multi_reduction <add>, %304, %cst_173 [1] : vector<16x32xf32> to vector<16xf32>
    %306 = vector.shape_cast %305 : vector<16xf32> to vector<16x1xf32>
    %cst_174 = arith.constant 3.200000e+01 : f32
    %307 = vector.broadcast %cst_174 : f32 to vector<16x1xf32>
    %308 = arith.divf %306, %307 : vector<16x1xf32>
    %cst_175 = arith.constant 9.99999996E-13 : f32
    %309 = vector.broadcast %cst_175 : f32 to vector<16x1xf32>
    %310 = arith.addf %308, %309 : vector<16x1xf32>
    %311 = math.rsqrt %310 : vector<16x1xf32>
    %312 = vector.broadcast %311 : vector<16x1xf32> to vector<16x32xf32>
    %313 = arith.mulf %303, %312 : vector<16x32xf32>
    %314 = vector.broadcast %295 : vector<1x32xf32> to vector<16x32xf32>
    %315 = arith.mulf %313, %314 : vector<16x32xf32>
    %316 = vector.broadcast %297 : vector<1x32xf32> to vector<16x32xf32>
    %317 = arith.addf %315, %316 : vector<16x32xf32>
    %318 = arith.truncf %317 : vector<16x32xf32> to vector<16x32xbf16>
    %c1_176 = arith.constant 1 : index
    %c0_177 = arith.constant 0 : index
    %c0_178 = arith.constant 0 : index
    %319 = vector.load %arg10[%c1_176, %c0_177, %c0_178] : memref<2x32x64xbf16, #tpu.memory_space<vmem>>, vector<1x32x64xbf16>
    %320 = vector.shape_cast %319 : vector<1x32x64xbf16> to vector<32x64xbf16>
    %cst_179 = arith.constant dense<0.000000e+00> : vector<16x64xf32>
    %321 = tpu.matmul %318, %320, %cst_179 {dimension_numbers = #tpu.dot_dimension_numbers<[1], [0], [0], [1], [0, 0, 1, 1], [], []>} : vector<16x32xbf16>, vector<32x64xbf16>, vector<16x64xf32> -> vector<16x64xf32>
    %c1_180 = arith.constant 1 : index
    %c0_181 = arith.constant 0 : index
    %c0_182 = arith.constant 0 : index
    %322 = vector.load %arg11[%c1_180, %c0_181, %c0_182] : memref<2x1x64xf32, #tpu.memory_space<vmem>>, vector<1x1x64xf32>
    %323 = vector.shape_cast %322 : vector<1x1x64xf32> to vector<1x64xf32>
    %324 = vector.broadcast %323 : vector<1x64xf32> to vector<16x64xf32>
    %325 = arith.addf %321, %324 : vector<16x64xf32>
    %cst_183 = arith.constant 5.000000e-01 : f32
    %326 = vector.broadcast %cst_183 : f32 to vector<16x64xf32>
    %327 = arith.mulf %326, %325 : vector<16x64xf32>
    %cst_184 = arith.constant 4.471500e-02 : f32
    %328 = vector.broadcast %cst_184 : f32 to vector<16x64xf32>
    %329 = arith.mulf %328, %325 : vector<16x64xf32>
    %330 = arith.mulf %329, %325 : vector<16x64xf32>
    %331 = arith.mulf %330, %325 : vector<16x64xf32>
    %332 = arith.addf %325, %331 : vector<16x64xf32>
    %cst_185 = arith.constant 0.797884583 : f32
    %333 = vector.broadcast %cst_185 : f32 to vector<16x64xf32>
    %334 = arith.mulf %333, %332 : vector<16x64xf32>
    %335 = math.tanh %334 : vector<16x64xf32>
    %cst_186 = arith.constant 1.000000e+00 : f32
    %336 = vector.broadcast %cst_186 : f32 to vector<16x64xf32>
    %337 = arith.addf %336, %335 : vector<16x64xf32>
    %338 = arith.mulf %327, %337 : vector<16x64xf32>
    %339 = arith.truncf %338 : vector<16x64xf32> to vector<16x64xbf16>
    %c1_187 = arith.constant 1 : index
    %c0_188 = arith.constant 0 : index
    %c0_189 = arith.constant 0 : index
    %340 = vector.load %arg12[%c1_187, %c0_188, %c0_189] : memref<2x64x32xbf16, #tpu.memory_space<vmem>>, vector<1x64x32xbf16>
    %341 = vector.shape_cast %340 : vector<1x64x32xbf16> to vector<64x32xbf16>
    %cst_190 = arith.constant dense<0.000000e+00> : vector<16x32xf32>
    %342 = tpu.matmul %339, %341, %cst_190 {dimension_numbers = #tpu.dot_dimension_numbers<[1], [0], [0], [1], [0, 0, 1, 1], [], []>} : vector<16x64xbf16>, vector<64x32xbf16>, vector<16x32xf32> -> vector<16x32xf32>
    %c9_191 = arith.constant 9 : index
    %c0_192 = arith.constant 0 : index
    %c0_193 = arith.constant 0 : index
    %343 = vector.load %arg9[%c9_191, %c0_192, %c0_193] : memref<12x1x32xf32, #tpu.memory_space<vmem>>, vector<1x1x32xf32>
    %344 = vector.shape_cast %343 : vector<1x1x32xf32> to vector<1x32xf32>
    %345 = vector.broadcast %344 : vector<1x32xf32> to vector<16x32xf32>
    %346 = arith.addf %342, %345 : vector<16x32xf32>
    %347 = arith.addf %317, %346 : vector<16x32xf32>
    %c10_194 = arith.constant 10 : index
    %c0_195 = arith.constant 0 : index
    %c0_196 = arith.constant 0 : index
    %348 = vector.load %arg9[%c10_194, %c0_195, %c0_196] : memref<12x1x32xf32, #tpu.memory_space<vmem>>, vector<1x1x32xf32>
    %349 = vector.shape_cast %348 : vector<1x1x32xf32> to vector<1x32xf32>
    %c11_197 = arith.constant 11 : index
    %c0_198 = arith.constant 0 : index
    %c0_199 = arith.constant 0 : index
    %350 = vector.load %arg9[%c11_197, %c0_198, %c0_199] : memref<12x1x32xf32, #tpu.memory_space<vmem>>, vector<1x1x32xf32>
    %351 = vector.shape_cast %350 : vector<1x1x32xf32> to vector<1x32xf32>
    %cst_200 = arith.constant dense<0.000000e+00> : vector<16xf32>
    %352 = vector.multi_reduction <add>, %347, %cst_200 [1] : vector<16x32xf32> to vector<16xf32>
    %353 = vector.shape_cast %352 : vector<16xf32> to vector<16x1xf32>
    %cst_201 = arith.constant 3.200000e+01 : f32
    %354 = vector.broadcast %cst_201 : f32 to vector<16x1xf32>
    %355 = arith.divf %353, %354 : vector<16x1xf32>
    %356 = vector.broadcast %355 : vector<16x1xf32> to vector<16x32xf32>
    %357 = arith.subf %347, %356 : vector<16x32xf32>
    %358 = arith.mulf %357, %357 : vector<16x32xf32>
    %cst_202 = arith.constant dense<0.000000e+00> : vector<16xf32>
    %359 = vector.multi_reduction <add>, %358, %cst_202 [1] : vector<16x32xf32> to vector<16xf32>
    %360 = vector.shape_cast %359 : vector<16xf32> to vector<16x1xf32>
    %cst_203 = arith.constant 3.200000e+01 : f32
    %361 = vector.broadcast %cst_203 : f32 to vector<16x1xf32>
    %362 = arith.divf %360, %361 : vector<16x1xf32>
    %cst_204 = arith.constant 9.99999996E-13 : f32
    %363 = vector.broadcast %cst_204 : f32 to vector<16x1xf32>
    %364 = arith.addf %362, %363 : vector<16x1xf32>
    %365 = math.rsqrt %364 : vector<16x1xf32>
    %366 = vector.broadcast %365 : vector<16x1xf32> to vector<16x32xf32>
    %367 = arith.mulf %357, %366 : vector<16x32xf32>
    %368 = vector.broadcast %349 : vector<1x32xf32> to vector<16x32xf32>
    %369 = arith.mulf %367, %368 : vector<16x32xf32>
    %370 = vector.broadcast %351 : vector<1x32xf32> to vector<16x32xf32>
    %371 = arith.addf %369, %370 : vector<16x32xf32>
    %372 = vector.shape_cast %371 : vector<16x32xf32> to vector<2x8x32xf32>
    %373 = vector.extract_strided_slice %372 {offsets = [0, 0, 0], sizes = [2, 1, 32], strides = [1, 1, 1]} : vector<2x8x32xf32> to vector<2x1x32xf32>
    %374 = vector.shape_cast %373 : vector<2x1x32xf32> to vector<2x32xf32>
    %c0_205 = arith.constant 0 : index
    %c0_206 = arith.constant 0 : index
    %375 = vector.load %arg13[%c0_205, %c0_206] : memref<2x32xf32, #tpu.memory_space<vmem>>, vector<1x32xf32>
    %376 = vector.broadcast %375 : vector<1x32xf32> to vector<2x32xf32>
    %377 = arith.mulf %374, %376 : vector<2x32xf32>
    %cst_207 = arith.constant dense<0.000000e+00> : vector<2xf32>
    %378 = vector.multi_reduction <add>, %377, %cst_207 [1] : vector<2x32xf32> to vector<2xf32>
    %379 = vector.shape_cast %378 : vector<2xf32> to vector<2x1xf32>
    %c1_208 = arith.constant 1 : index
    %c0_209 = arith.constant 0 : index
    %380 = vector.load %arg13[%c1_208, %c0_209] : memref<2x32xf32, #tpu.memory_space<vmem>>, vector<1x1xf32>
    %381 = vector.broadcast %380 : vector<1x1xf32> to vector<2x1xf32>
    %382 = arith.addf %379, %381 : vector<2x1xf32>
    %c0_210 = arith.constant 0 : index
    %c0_211 = arith.constant 0 : index
    %383 = vector.load %arg15[%c0_210, %c0_211] : memref<2x1xf32, #tpu.memory_space<vmem>>, vector<2x1xf32>
    tpu.vector_store %arg15[%c0_210, %c0_211], %382 {strides = array<i32>} : memref<2x1xf32, #tpu.memory_space<vmem>>, vector<2x1xf32>,
    %c0_212 = arith.constant 0 : index
    %c0_213 = arith.constant 0 : index
    %384 = vector.load %arg14[%c0_212, %c0_213] : memref<2x1xf32, #tpu.memory_space<vmem>>, vector<2x1xf32>
    %cst_214 = arith.constant 0.000000e+00 : f32
    %385 = vector.broadcast %cst_214 : f32 to vector<2x1xf32>
    %386 = arith.maximumf %382, %385 : vector<2x1xf32>
    %387 = arith.mulf %382, %384 : vector<2x1xf32>
    %388 = arith.subf %386, %387 : vector<2x1xf32>
    %389 = math.absf %382 : vector<2x1xf32>
    %cst_215 = arith.constant 0.000000e+00 : f32
    %390 = vector.broadcast %cst_215 : f32 to vector<2x1xf32>
    %391 = arith.subf %390, %389 : vector<2x1xf32>
    %392 = math.exp %391 : vector<2x1xf32>
    %393 = math.log1p %392 : vector<2x1xf32>
    %394 = arith.addf %388, %393 : vector<2x1xf32>
    %395 = vector.shape_cast %394 : vector<2x1xf32> to vector<1x2x1xf32>
    %cst_216 = arith.constant dense<0.000000e+00> : vector<1xf32>
    %396 = vector.multi_reduction <add>, %395, %cst_216 [1, 2] : vector<1x2x1xf32> to vector<1xf32>
    %397 = vector.shape_cast %396 : vector<1xf32> to vector<1x1x1xf32>
    %398 = vector.extract %397[0, 0, 0] : f32 from vector<1x1x1xf32>
    %399 = vector.broadcast %398 : f32 to vector<1x1xf32>
    %cst_217 = arith.constant 2.000000e+00 : f32
    %400 = vector.broadcast %cst_217 : f32 to vector<1x1xf32>
    %401 = arith.divf %399, %400 : vector<1x1xf32>
    %c0_218 = arith.constant 0 : index
    %c0_219 = arith.constant 0 : index
    %402 = vector.load %arg16[%c0_218, %c0_219] : memref<1x1xf32, #tpu.memory_space<vmem>>, vector<1x1xf32>
    tpu.vector_store %arg16[%c0_218, %c0_219], %401 {strides = array<i32>} : memref<1x1xf32, #tpu.memory_space<vmem>>, vector<1x1xf32>,
    return
  }
  func.func @transform_0(%arg0: i32) -> (i32, i32) {
    %c0_i32 = arith.constant 0 : i32
    %c0_i32_0 = arith.constant 0 : i32
    %c0_i32_1 = arith.constant 0 : i32
    return %c0_i32, %c0_i32_0 : i32, i32
  }
  func.func @transform_1(%arg0: i32) -> (i32, i32) {
    %c0_i32 = arith.constant 0 : i32
    %c0_i32_0 = arith.constant 0 : i32
    %c0_i32_1 = arith.constant 0 : i32
    return %c0_i32, %c0_i32_0 : i32, i32
  }
  func.func @transform_2(%arg0: i32) -> (i32, i32) {
    %c0_i32 = arith.constant 0 : i32
    %c0_i32_0 = arith.constant 0 : i32
    %c0_i32_1 = arith.constant 0 : i32
    return %c0_i32, %c0_i32_0 : i32, i32
  }
  func.func @transform_3(%arg0: i32) -> (i32, i32) {
    %c0_i32 = arith.constant 0 : i32
    %c0_i32_0 = arith.constant 0 : i32
    %c0_i32_1 = arith.constant 0 : i32
    return %c0_i32, %c0_i32_0 : i32, i32
  }
  func.func @transform_4(%arg0: i32) -> (i32, i32) {
    %c0_i32 = arith.constant 0 : i32
    %c0_i32_0 = arith.constant 0 : i32
    %c0_i32_1 = arith.constant 0 : i32
    return %c0_i32, %c0_i32_0 : i32, i32
  }
  func.func @transform_5(%arg0: i32) -> (i32, i32, i32) {
    %c0_i32 = arith.constant 0 : i32
    %c0_i32_0 = arith.constant 0 : i32
    %c0_i32_1 = arith.constant 0 : i32
    %c0_i32_2 = arith.constant 0 : i32
    return %c0_i32, %c0_i32_0, %c0_i32_1 : i32, i32, i32
  }
  func.func @transform_6(%arg0: i32) -> (i32, i32, i32) {
    %c0_i32 = arith.constant 0 : i32
    %c0_i32_0 = arith.constant 0 : i32
    %c0_i32_1 = arith.constant 0 : i32
    %c0_i32_2 = arith.constant 0 : i32
    return %c0_i32, %c0_i32_0, %c0_i32_1 : i32, i32, i32
  }
  func.func @transform_7(%arg0: i32) -> (i32, i32, i32) {
    %c0_i32 = arith.constant 0 : i32
    %c0_i32_0 = arith.constant 0 : i32
    %c0_i32_1 = arith.constant 0 : i32
    %c0_i32_2 = arith.constant 0 : i32
    return %c0_i32, %c0_i32_0, %c0_i32_1 : i32, i32, i32
  }
  func.func @transform_8(%arg0: i32) -> (i32, i32, i32) {
    %c0_i32 = arith.constant 0 : i32
    %c0_i32_0 = arith.constant 0 : i32
    %c0_i32_1 = arith.constant 0 : i32
    %c0_i32_2 = arith.constant 0 : i32
    return %c0_i32, %c0_i32_0, %c0_i32_1 : i32, i32, i32
  }
  func.func @transform_9(%arg0: i32) -> (i32, i32, i32) {
    %c0_i32 = arith.constant 0 : i32
    %c0_i32_0 = arith.constant 0 : i32
    %c0_i32_1 = arith.constant 0 : i32
    %c0_i32_2 = arith.constant 0 : i32
    return %c0_i32, %c0_i32_0, %c0_i32_1 : i32, i32, i32
  }
  func.func @transform_10(%arg0: i32) -> (i32, i32, i32) {
    %c0_i32 = arith.constant 0 : i32
    %c0_i32_0 = arith.constant 0 : i32
    %c0_i32_1 = arith.constant 0 : i32
    %c0_i32_2 = arith.constant 0 : i32
    return %c0_i32, %c0_i32_0, %c0_i32_1 : i32, i32, i32
  }
  func.func @transform_11(%arg0: i32) -> (i32, i32, i32) {
    %c0_i32 = arith.constant 0 : i32
    %c0_i32_0 = arith.constant 0 : i32
    %c0_i32_1 = arith.constant 0 : i32
    %c0_i32_2 = arith.constant 0 : i32
    return %c0_i32, %c0_i32_0, %c0_i32_1 : i32, i32, i32
  }
  func.func @transform_12(%arg0: i32) -> (i32, i32) {
    %c0_i32 = arith.constant 0 : i32
    %c0_i32_0 = arith.constant 0 : i32
    %c0_i32_1 = arith.constant 0 : i32
    return %c0_i32, %c0_i32_0 : i32, i32
  }
  func.func @transform_13(%arg0: i32) -> (i32, i32) {
    %c0_i32 = arith.constant 0 : i32
    %c0_i32_0 = arith.constant 0 : i32
    %c0_i32_1 = arith.constant 0 : i32
    return %c0_i32, %c0_i32_0 : i32, i32
  }
  func.func @transform_14(%arg0: i32) -> (i32, i32) {
    %c0_i32 = arith.constant 0 : i32
    %c0_i32_0 = arith.constant 0 : i32
    %c0_i32_1 = arith.constant 0 : i32
    return %c0_i32, %c0_i32_0 : i32, i32
  }
  func.func @transform_15(%arg0: i32) -> (i32, i32) {
    %c0_i32 = arith.constant 0 : i32
    %c0_i32_0 = arith.constant 0 : i32
    %c0_i32_1 = arith.constant 0 : i32
    return %c0_i32, %c0_i32_0 : i32, i32
  }
}

</mosaic_0001>

<llo_original>
// kernel: tpu_custom_call.1
$region0: #{tpu_custom_call.1}
  #allocation0 [shape = 'u32[]', space=smem, size = 0x4, offset = 0x4, fixed_abs, tag = 'smem constant byte address 0x4 - core index']
  #allocation1 [shape = 'u32[72,128]{1,0:T(1,128)}', space=vmem, size = 0x9000, scoped, tag = 'internal scratch']
  %s0 = inlined_call_operand.vmem [shape: s32[16,1], index: 0, kind: input, shape index: {}]
  %s1 = inlined_call_operand.vmem [shape: s32[16,1], index: 1, kind: input, shape index: {}]
  %s2 = inlined_call_operand.vmem [shape: s32[2,8], index: 2, kind: input, shape index: {}]
  %s3 = inlined_call_operand.vmem [shape: f32[128,32], index: 3, kind: input, shape index: {}]
  %s4 = inlined_call_operand.vmem [shape: f32[20,32], index: 4, kind: input, shape index: {}]
  %s5 = inlined_call_operand.vmem [shape: bf16[12,32,16], index: 5, kind: input, shape index: {}]
  %s6 = inlined_call_operand.vmem [shape: f32[12,1,16], index: 6, kind: input, shape index: {}]
  %s7 = inlined_call_operand.vmem [shape: bf16[4,16,32], index: 7, kind: input, shape index: {}]
  %s8 = inlined_call_operand.vmem [shape: f32[12,1,32], index: 8, kind: input, shape index: {}]
  %s9 = inlined_call_operand.vmem [shape: bf16[2,32,64], index: 9, kind: input, shape index: {}]
  %s10 = inlined_call_operand.vmem [shape: f32[2,1,64], index: 10, kind: input, shape index: {}]
  %s11 = inlined_call_operand.vmem [shape: bf16[2,64,32], index: 11, kind: input, shape index: {}]
  %s12 = inlined_call_operand.vmem [shape: f32[2,32], index: 12, kind: input, shape index: {}]
  %s13 = inlined_call_operand.vmem [shape: f32[2,1], index: 13, kind: input, shape index: {}]
  %s14 = inlined_call_operand.vmem [shape: f32[2,1], index: 14, kind: output, shape index: {0}]
  %s15 = inlined_call_operand.hbm [shape: f32[1,1], index: 15, kind: output, shape index: {1}]
  %16 = xla_tuple %s14, %s15
  %s17 = sld [smem:[#allocation0]]
  $region74: #{tpu_custom_call.1} parent=0
    _
  %s19 = ssub.s32 1, %s17
  %s20 = scalar_select 0, %s19, %s17
  $region1: #{tpu_custom_call.1} parent=0
    #allocation2 [shape = 'u8[512]{0}', space=vmem, size = 0x400, scoped, tag = 'output window, operand 1, single buffered']
    #allocation3 [shape = 's32[1]{0}', space=sflag, size = 0x4, scoped, tag = 'scoped memory for tpu_custom_call.1']
    %21 = vsyncpa [#allocation3], 0
    // Predicated region
    $region2: #{tpu_custom_call.1} parent=1 // pred_check
      _
    $region3: #{tpu_custom_call.1} parent=1 // pred_check_branch
      %23 = sbr.rel (0) target = $region5
    $region4: #{tpu_custom_call.1} parent=1 // pred_region
      _
    $region5: #{tpu_custom_call.1} parent=1 // pred_fallthru
      _
    // Predicated region
    $region6: #{tpu_custom_call.1} parent=1 // pred_check
      _
    $region7: #{tpu_custom_call.1} parent=1 // pred_check_branch
      %25 = sbr.rel (0) target = $region9
    $region8: #{tpu_custom_call.1} parent=1 // pred_region
      _
    $region9: #{tpu_custom_call.1} parent=1 // pred_fallthru
      _
    // Predicated region
    $region10: #{tpu_custom_call.1} parent=1 // pred_check
      _
    $region11: #{tpu_custom_call.1} parent=1 // pred_check_branch
      %27 = sbr.rel (0) target = $region13
    $region12: #{tpu_custom_call.1} parent=1 // pred_region
      _
    $region13: #{tpu_custom_call.1} parent=1 // pred_fallthru
      _
    // Predicated region
    $region14: #{tpu_custom_call.1} parent=1 // pred_check
      _
    $region15: #{tpu_custom_call.1} parent=1 // pred_check_branch
      %29 = sbr.rel (0) target = $region17
    $region16: #{tpu_custom_call.1} parent=1 // pred_region
      _
    $region17: #{tpu_custom_call.1} parent=1 // pred_fallthru
      _
    // Predicated region
    $region18: #{tpu_custom_call.1} parent=1 // pred_check
      _
    $region19: #{tpu_custom_call.1} parent=1 // pred_check_branch
      %31 = sbr.rel (0) target = $region21
    $region20: #{tpu_custom_call.1} parent=1 // pred_region
      _
    $region21: #{tpu_custom_call.1} parent=1 // pred_fallthru
      _
    // Predicated region
    $region22: #{tpu_custom_call.1} parent=1 // pred_check
      _
    $region23: #{tpu_custom_call.1} parent=1 // pred_check_branch
      %33 = sbr.rel (0) target = $region25
    $region24: #{tpu_custom_call.1} parent=1 // pred_region
      _
    $region25: #{tpu_custom_call.1} parent=1 // pred_fallthru
      _
    // Predicated region
    $region26: #{tpu_custom_call.1} parent=1 // pred_check
      _
    $region27: #{tpu_custom_call.1} parent=1 // pred_check_branch
      %35 = sbr.rel (0) target = $region29
    $region28: #{tpu_custom_call.1} parent=1 // pred_region
      _
    $region29: #{tpu_custom_call.1} parent=1 // pred_fallthru
      _
    // Predicated region
    $region30: #{tpu_custom_call.1} parent=1 // pred_check
      _
    $region31: #{tpu_custom_call.1} parent=1 // pred_check_branch
      %37 = sbr.rel (0) target = $region33
    $region32: #{tpu_custom_call.1} parent=1 // pred_region
      _
    $region33: #{tpu_custom_call.1} parent=1 // pred_fallthru
      _
    // Predicated region
    $region34: #{tpu_custom_call.1} parent=1 // pred_check
      _
    $region35: #{tpu_custom_call.1} parent=1 // pred_check_branch
      %39 = sbr.rel (0) target = $region37
    $region36: #{tpu_custom_call.1} parent=1 // pred_region
      _
    $region37: #{tpu_custom_call.1} parent=1 // pred_fallthru
      _
    // Predicated region
    $region38: #{tpu_custom_call.1} parent=1 // pred_check
      _
    $region39: #{tpu_custom_call.1} parent=1 // pred_check_branch
      %41 = sbr.rel (0) target = $region41
    $region40: #{tpu_custom_call.1} parent=1 // pred_region
      _
    $region41: #{tpu_custom_call.1} parent=1 // pred_fallthru
      _
    // Predicated region
    $region42: #{tpu_custom_call.1} parent=1 // pred_check
      _
    $region43: #{tpu_custom_call.1} parent=1 // pred_check_branch
      %43 = sbr.rel (0) target = $region45
    $region44: #{tpu_custom_call.1} parent=1 // pred_region
      _
    $region45: #{tpu_custom_call.1} parent=1 // pred_fallthru
      _
    // Predicated region
    $region46: #{tpu_custom_call.1} parent=1 // pred_check
      _
    $region47: #{tpu_custom_call.1} parent=1 // pred_check_branch
      %45 = sbr.rel (0) target = $region49
    $region48: #{tpu_custom_call.1} parent=1 // pred_region
      _
    $region49: #{tpu_custom_call.1} parent=1 // pred_fallthru
      _
    // Predicated region
    $region50: #{tpu_custom_call.1} parent=1 // pred_check
      _
    $region51: #{tpu_custom_call.1} parent=1 // pred_check_branch
      %47 = sbr.rel (0) target = $region53
    $region52: #{tpu_custom_call.1} parent=1 // pred_region
      _
    $region53: #{tpu_custom_call.1} parent=1 // pred_fallthru
      _
    // Predicated region
    $region54: #{tpu_custom_call.1} parent=1 // pred_check
      _
    $region55: #{tpu_custom_call.1} parent=1 // pred_check_branch
      %49 = sbr.rel (0) target = $region57
    $region56: #{tpu_custom_call.1} parent=1 // pred_region
      _
    $region57: #{tpu_custom_call.1} parent=1 // pred_fallthru
      _
    %v51 = vld [vmem:[%s0] sm:$0xff]
    %v52 = vld [vmem:[%s0 + $0x8] sm:$0xff]
    %v53 = vlaneseq
    %v54 = vand.u32 %v53, 127
    %55 = vset.pattern.permute.xlu0 0
    %56 = vperm.xlu0 %55, %v51
    %v57 = vpop.permute.xlu0 %56
    %58 = vset.pattern.permute.xlu0 0
    %59 = vperm.xlu0 %58, %v52
    %v60 = vpop.permute.xlu0 %59
    %vm61 = vcmp.eq.s32.totalorder %v57, %v54
    %vm62 = vcmp.eq.s32.totalorder %v60, %v54
    %v63 = vsel %vm61, 1, 0
    %v64 = vsel %vm62, 1, 0
    %v65 = vcvt.s32.f32 %v63
    %v66 = vcvt.s32.f32 %v64
    %v67 = vld [vmem:[%s3] sm:$0xff]
    %v68 = vld [vmem:[%s3 + $0x8] sm:$0xff]
    %v69 = vld [vmem:[%s3 + $0x10] sm:$0xff]
    %v70 = vld [vmem:[%s3 + $0x18] sm:$0xff]
    %v71 = vld [vmem:[%s3 + $0x20] sm:$0xff]
    %v72 = vld [vmem:[%s3 + $0x28] sm:$0xff]
    %v73 = vld [vmem:[%s3 + $0x30] sm:$0xff]
    %v74 = vld [vmem:[%s3 + $0x38] sm:$0xff]
    %v75 = vld [vmem:[%s3 + $0x40] sm:$0xff]
    %v76 = vld [vmem:[%s3 + $0x48] sm:$0xff]
    %v77 = vld [vmem:[%s3 + $0x50] sm:$0xff]
    %v78 = vld [vmem:[%s3 + $0x58] sm:$0xff]
    %v79 = vld [vmem:[%s3 + $0x60] sm:$0xff]
    %v80 = vld [vmem:[%s3 + $0x68] sm:$0xff]
    %v81 = vld [vmem:[%s3 + $0x70] sm:$0xff]
    %v82 = vld [vmem:[%s3 + $0x78] sm:$0xff]
    %v83 = vld [vmem:[%s4] sm:$0xff]
    %v84 = vld [vmem:[%s1] sm:$0xff]
    %v85 = vld [vmem:[%s1 + $0x8] sm:$0xff]
    %v86 = vcvt.s32.f32 %v84
    %v87 = vcvt.s32.f32 %v85
    %v88 = vld [vmem:[%s4 + $0x10] sm:$0x1]
    %v89 = vld [vmem:[%s4 + $0x11] sm:$0x1]
    %v90 = vsub.f32 %v89, %v88
    %92 = vset.pattern.permute.xlu0 0
    %93 = vperm.xlu0 %92, %v86
    %v94 = vpop.permute.xlu0 %93
    %97 = vset.pattern.permute.xlu0 0
    %98 = vperm.xlu0 %97, %v87
    %v99 = vpop.permute.xlu0 %98
    %v101 = vperm.slane %v90, 0
    %v102 = vmul.f32 %v94, %v101
    %v103 = vmul.f32 %v99, %v101
    %v104 = vperm.slane %v88, 0
    %v105 = vadd.f32 %v104, %v102
    %v106 = vadd.f32 %v104, %v103
    %107 = vmatpush.msra.mxu0 %v82
    %108 = vmatpush.msra.mxu0 %v81
    %109 = vmatpush.msra.mxu0 %v80
    %110 = vmatpush.msra.mxu0 %v79
    %111 = vmatpush.msra.mxu0 %v78
    %112 = vmatpush.msra.mxu0 %v77
    %113 = vmatpush.msra.mxu0 %v76
    %114 = vmatpush.msra.mxu0 %v75
    %115 = vmatpush.msra.mxu0 %v74
    %116 = vmatpush.msra.mxu0 %v73
    %117 = vmatpush.msra.mxu0 %v72
    %118 = vmatpush.msra.mxu0 %v71
    %119 = vmatpush.msra.mxu0 %v70
    %120 = vmatpush.msra.mxu0 %v69
    %121 = vmatpush.msra.mxu0 %v68
    %122 = vmatpush.msra.mxu0 %v67
    %123 = vmatmul.f32.gmra.mxu0 %v65
    %v124 = vpop.f32.mrf.mxu0
    %v125 = vadd.f32 %v83, %v124
    %126 = vmatmul.f32.gmra.mxu0 %v66
    %v127 = vpop.f32.mrf.mxu0
    %v128 = vadd.f32 %v83, %v127
    %129 = vdwg.mxu0
    %v130 = vadd.f32 %v125, %v105
    %v131 = vadd.f32 %v128, %v106
    %v132 = vld [vmem:[%s4 + $0x12] sm:$0x1]
    %v133 = vld [vmem:[%s4 + $0x13] sm:$0x1]
    %vm134 = vcmask 261120
    %v135 = vsel %vm134, %v130, 0.0
    %136 = vadd.xlane.f32.xlu0 %v135
    %v137 = vpop.xlane.xlu0 %136
    %v138 = vsel %vm134, %v131, 0.0
    %139 = vadd.xlane.f32.xlu0 %v138
    %v140 = vpop.xlane.xlu0 %139
    %v141 = vrcp.pop 32.0
    %v142 = vmul.f32 32.0, %v141
    %v143 = vsub.f32 1.0, %v142
    %v144 = vmul.f32 %v141, %v143
    %v145 = vadd.f32 %v141, %v144
    %vm146 = vweird.f32 %v141
    %v147 = vsel %vm146, %v141, %v145
    %v148 = vmul.f32 %v137, %v147
    %v149 = vmul.f32 %v140, %v147
    %v150 = vsub.f32 %v130, %v148
    %v151 = vsub.f32 %v131, %v149
    %v152 = vmul.f32 %v150, %v150
    %v153 = vmul.f32 %v151, %v151
    %v154 = vsel %vm134, %v152, 0.0
    %155 = vadd.xlane.f32.xlu0 %v154
    %v156 = vpop.xlane.xlu0 %155
    %v157 = vsel %vm134, %v153, 0.0
    %158 = vadd.xlane.f32.xlu0 %v157
    %v159 = vpop.xlane.xlu0 %158
    %v160 = vmul.f32 %v156, %v147
    %v161 = vmul.f32 %v159, %v147
    %v162 = vadd.f32 %v160, 1e-12
    %v163 = vadd.f32 %v161, 1e-12
    %v164 = vrsqrt.pop %v162
    %v165 = vmul.f32 %v164, %v162
    %v166 = vmul.f32 %v165, %v164
    %v167 = vmul.f32 0.5, %v166
    %v168 = vsub.f32 1.5, %v167
    %v169 = vmul.f32 %v164, %v168
    %vm170 = vweird.f32 %v162
    %vm171 = vweird.f32 %v164
    %vm172 = vmor %vm170, %vm171
    %v173 = vsel %vm172, %v164, %v169
    %v174 = vrsqrt.pop %v163
    %v175 = vmul.f32 %v174, %v163
    %v176 = vmul.f32 %v175, %v174
    %v177 = vmul.f32 0.5, %v176
    %v178 = vsub.f32 1.5, %v177
    %v179 = vmul.f32 %v174, %v178
    %vm180 = vweird.f32 %v163
    %vm181 = vweird.f32 %v174
    %vm182 = vmor %vm180, %vm181
    %v183 = vsel %vm182, %v174, %v179
    %v184 = vmul.f32 %v150, %v173
    %v185 = vmul.f32 %v151, %v183
    %v186 = vperm.slane %v132, 0
    %v187 = vmul.f32 %v184, %v186
    %v188 = vmul.f32 %v185, %v186
    %v189 = vperm.slane %v133, 0
    %v190 = vadd.f32 %v187, %v189
    %v191 = vadd.f32 %v188, %v189
    %v192 = vld [vmem:[%s2] sm:$0x3]
    %v193 = vcvt.s32.f32 %v192
    %v195 = vrot.slane %v193, 6
    %vm197 = vcmask 1041408
    %v198 = vsel %vm197, %v193, %v195
    %v199 = vsub.f32 1.0, %v198
    %v200 = vmul.f32 %v199, -1e+09
    %v202 = vrot.slane %v200, 1
    %v203 = vrot.slane %v200, 2
    %v204 = vrot.slane %v200, 3
    %v205 = vpack.c.bf16 %v191, %v190
    %v206 = vld [vmem:[%s5] sm:$0xf]
    %v207 = vld [vmem:[%s5 + $0x4] sm:$0xf]
    %v208 = vld [vmem:[%s5 + $0x8] sm:$0xf]
    %v209 = vld [vmem:[%s5 + $0xc] sm:$0xf]
    %v210 = vld [vmem:[%s6] sm:$0x1]
    %v212 = vperm.slane %v210, 0
    %v218 = vunpack.c.l.b16 %v206
    %v219 = vunpack.c.l.b16 %v207
    %v220 = vunpack.c.l.b16 %v208
    %v221 = vunpack.c.l.b16 %v209
    %v222 = vpack.c.b16 %v219, %v218
    %v223 = vpack.c.b16 %v221, %v220
    %v227 = vsel %vm134, %v205, 0
    %229 = vmatpush.bf16.msra.mxu0 0
    %230 = vmatpush.bf16.msra.mxu0 0
    %231 = vmatpush.bf16.msra.mxu0 0
    %232 = vmatpush.bf16.msra.mxu0 0
    %233 = vmatpush.bf16.msra.mxu0 0
    %234 = vmatpush.bf16.msra.mxu0 0
    %235 = vmatpush.bf16.msra.mxu0 %v223
    %236 = vmatpush.bf16.msra.mxu0 %v222
    %237 = vmatmul.bf16.gmra.mxu0 %v227
    %v238 = vpop.f32.mrf.mxu0
    %v239 = vadd.f32 %v212, %v238
    %v240 = vpop.f32.mrf.mxu0
    %v241 = vadd.f32 %v212, %v240
    %242 = vdwg.mxu0
    %s243 = scalar_lea.vmem %s5, 16
    %v244 = vld [vmem:[%s243] sm:$0xf]
    %v245 = vld [vmem:[%s243 + $0x4] sm:$0xf]
    %v246 = vld [vmem:[%s243 + $0x8] sm:$0xf]
    %v247 = vld [vmem:[%s243 + $0xc] sm:$0xf]
    %s248 = scalar_lea.vmem %s6, 1
    %v249 = vld [vmem:[%s248] sm:$0x1]
    %v251 = vperm.slane %v249, 0
    %v257 = vunpack.c.l.b16 %v244
    %v258 = vunpack.c.l.b16 %v245
    %v259 = vunpack.c.l.b16 %v246
    %v260 = vunpack.c.l.b16 %v247
    %v261 = vpack.c.b16 %v258, %v257
    %v262 = vpack.c.b16 %v260, %v259
    %265 = vmatpush.bf16.msra.mxu0 0
    %266 = vmatpush.bf16.msra.mxu0 0
    %267 = vmatpush.bf16.msra.mxu0 0
    %268 = vmatpush.bf16.msra.mxu0 0
    %269 = vmatpush.bf16.msra.mxu0 0
    %270 = vmatpush.bf16.msra.mxu0 0
    %271 = vmatpush.bf16.msra.mxu0 %v262
    %272 = vmatpush.bf16.msra.mxu0 %v261
    %273 = vmatmul.bf16.gmra.mxu0 %v227
    %v274 = vpop.f32.mrf.mxu0
    %v275 = vadd.f32 %v251, %v274
    %v276 = vpop.f32.mrf.mxu0
    %v277 = vadd.f32 %v251, %v276
    %278 = vdwg.mxu0
    %s279 = scalar_lea.vmem %s5, 64
    %v280 = vld [vmem:[%s279] sm:$0xf]
    %v281 = vld [vmem:[%s279 + $0x4] sm:$0xf]
    %v282 = vld [vmem:[%s279 + $0x8] sm:$0xf]
    %v283 = vld [vmem:[%s279 + $0xc] sm:$0xf]
    %s284 = scalar_lea.vmem %s6, 4
    %v285 = vld [vmem:[%s284] sm:$0x1]
    %v287 = vperm.slane %v285, 0
    %v293 = vunpack.c.l.b16 %v280
    %v294 = vunpack.c.l.b16 %v281
    %v295 = vunpack.c.l.b16 %v282
    %v296 = vunpack.c.l.b16 %v283
    %v297 = vpack.c.b16 %v294, %v293
    %v298 = vpack.c.b16 %v296, %v295
    %301 = vmatpush.bf16.msra.mxu0 0
    %302 = vmatpush.bf16.msra.mxu0 0
    %303 = vmatpush.bf16.msra.mxu0 0
    %304 = vmatpush.bf16.msra.mxu0 0
    %305 = vmatpush.bf16.msra.mxu0 0
    %306 = vmatpush.bf16.msra.mxu0 0
    %307 = vmatpush.bf16.msra.mxu0 %v298
    %308 = vmatpush.bf16.msra.mxu0 %v297
    %309 = vmatmul.bf16.gmra.mxu0 %v227
    %v310 = vpop.f32.mrf.mxu0
    %v311 = vadd.f32 %v287, %v310
    %v312 = vpop.f32.mrf.mxu0
    %v313 = vadd.f32 %v287, %v312
    %314 = vdwg.mxu0
    %s315 = scalar_lea.vmem %s5, 80
    %v316 = vld [vmem:[%s315] sm:$0xf]
    %v317 = vld [vmem:[%s315 + $0x4] sm:$0xf]
    %v318 = vld [vmem:[%s315 + $0x8] sm:$0xf]
    %v319 = vld [vmem:[%s315 + $0xc] sm:$0xf]
    %s320 = scalar_lea.vmem %s6, 5
    %v321 = vld [vmem:[%s320] sm:$0x1]
    %v323 = vperm.slane %v321, 0
    %v329 = vunpack.c.l.b16 %v316
    %v330 = vunpack.c.l.b16 %v317
    %v331 = vunpack.c.l.b16 %v318
    %v332 = vunpack.c.l.b16 %v319
    %v333 = vpack.c.b16 %v330, %v329
    %v334 = vpack.c.b16 %v332, %v331
    %337 = vmatpush.bf16.msra.mxu0 0
    %338 = vmatpush.bf16.msra.mxu0 0
    %339 = vmatpush.bf16.msra.mxu0 0
    %340 = vmatpush.bf16.msra.mxu0 0
    %341 = vmatpush.bf16.msra.mxu0 0
    %342 = vmatpush.bf16.msra.mxu0 0
    %343 = vmatpush.bf16.msra.mxu0 %v334
    %344 = vmatpush.bf16.msra.mxu0 %v333
    %345 = vmatmul.bf16.gmra.mxu0 %v227
    %v346 = vpop.f32.mrf.mxu0
    %v347 = vadd.f32 %v323, %v346
    %v348 = vpop.f32.mrf.mxu0
    %v349 = vadd.f32 %v323, %v348
    %350 = vdwg.mxu0
    %s351 = scalar_lea.vmem %s5, 128
    %v352 = vld [vmem:[%s351] sm:$0xf]
    %v353 = vld [vmem:[%s351 + $0x4] sm:$0xf]
    %v354 = vld [vmem:[%s351 + $0x8] sm:$0xf]
    %v355 = vld [vmem:[%s351 + $0xc] sm:$0xf]
    %s356 = scalar_lea.vmem %s6, 8
    %v357 = vld [vmem:[%s356] sm:$0x1]
    %v359 = vperm.slane %v357, 0
    %v365 = vunpack.c.l.b16 %v352
    %v366 = vunpack.c.l.b16 %v353
    %v367 = vunpack.c.l.b16 %v354
    %v368 = vunpack.c.l.b16 %v355
    %v369 = vpack.c.b16 %v366, %v365
    %v370 = vpack.c.b16 %v368, %v367
    %373 = vmatpush.bf16.msra.mxu0 0
    %374 = vmatpush.bf16.msra.mxu0 0
    %375 = vmatpush.bf16.msra.mxu0 0
    %376 = vmatpush.bf16.msra.mxu0 0
    %377 = vmatpush.bf16.msra.mxu0 0
    %378 = vmatpush.bf16.msra.mxu0 0
    %379 = vmatpush.bf16.msra.mxu0 %v370
    %380 = vmatpush.bf16.msra.mxu0 %v369
    %381 = vmatmul.bf16.gmra.mxu0 %v227
    %v382 = vpop.f32.mrf.mxu0
    %v383 = vadd.f32 %v359, %v382
    %v384 = vpop.f32.mrf.mxu0
    %v385 = vadd.f32 %v359, %v384
    %386 = vdwg.mxu0
    %s387 = scalar_lea.vmem %s5, 144
    %v388 = vld [vmem:[%s387] sm:$0xf]
    %v389 = vld [vmem:[%s387 + $0x4] sm:$0xf]
    %v390 = vld [vmem:[%s387 + $0x8] sm:$0xf]
    %v391 = vld [vmem:[%s387 + $0xc] sm:$0xf]
    %s392 = scalar_lea.vmem %s6, 9
    %v393 = vld [vmem:[%s392] sm:$0x1]
    %v395 = vperm.slane %v393, 0
    %v401 = vunpack.c.l.b16 %v388
    %v402 = vunpack.c.l.b16 %v389
    %v403 = vunpack.c.l.b16 %v390
    %v404 = vunpack.c.l.b16 %v391
    %v405 = vpack.c.b16 %v402, %v401
    %v406 = vpack.c.b16 %v404, %v403
    %409 = vmatpush.bf16.msra.mxu0 0
    %410 = vmatpush.bf16.msra.mxu0 0
    %411 = vmatpush.bf16.msra.mxu0 0
    %412 = vmatpush.bf16.msra.mxu0 0
    %413 = vmatpush.bf16.msra.mxu0 0
    %414 = vmatpush.bf16.msra.mxu0 0
    %415 = vmatpush.bf16.msra.mxu0 %v406
    %416 = vmatpush.bf16.msra.mxu0 %v405
    %417 = vmatmul.bf16.gmra.mxu0 %v227
    %v418 = vpop.f32.mrf.mxu0
    %v419 = vadd.f32 %v395, %v418
    %v420 = vpop.f32.mrf.mxu0
    %v421 = vadd.f32 %v395, %v420
    %422 = vdwg.mxu0
    %vm423 = vcmask 130048
    %v425 = vsel %vm423, %v239, 0
    %v428 = vsel %vm423, %v311, 0
    %430 = vmatpush.xpose.msra.mxu0 0.0
    %431 = vmatpush.xpose.msra.mxu0 0.0
    %432 = vmatpush.xpose.msra.mxu0 0.0
    %433 = vmatpush.xpose.msra.mxu0 0.0
    %434 = vmatpush.xpose.msra.mxu0 0.0
    %435 = vmatpush.xpose.msra.mxu0 0.0
    %436 = vmatpush.xpose.msra.mxu0 0.0
    %437 = vmatpush.xpose.msra.mxu0 0.0
    %438 = vmatpush.xpose.msra.mxu0 0.0
    %439 = vmatpush.xpose.msra.mxu0 0.0
    %440 = vmatpush.xpose.msra.mxu0 0.0
    %441 = vmatpush.xpose.msra.mxu0 0.0
    %442 = vmatpush.xpose.msra.mxu0 0.0
    %443 = vmatpush.xpose.msra.mxu0 0.0
    %444 = vmatpush.xpose.msra.mxu0 0.0
    %445 = vmatpush.xpose.msra.mxu0 %v428
    %446 = vmatmul.f32.gmra.mxu0 %v425
    %v447 = vpop.f32.mrf.mxu0
    %v448 = vadd.f32 0.0, %v447
    %449 = vdwg.mxu0
    %v451 = vsel %vm423, %v241, 0
    %v454 = vsel %vm423, %v313, 0
    %456 = vmatpush.xpose.msra.mxu0 0.0
    %457 = vmatpush.xpose.msra.mxu0 0.0
    %458 = vmatpush.xpose.msra.mxu0 0.0
    %459 = vmatpush.xpose.msra.mxu0 0.0
    %460 = vmatpush.xpose.msra.mxu0 0.0
    %461 = vmatpush.xpose.msra.mxu0 0.0
    %462 = vmatpush.xpose.msra.mxu0 0.0
    %463 = vmatpush.xpose.msra.mxu0 0.0
    %464 = vmatpush.xpose.msra.mxu0 0.0
    %465 = vmatpush.xpose.msra.mxu0 0.0
    %466 = vmatpush.xpose.msra.mxu0 0.0
    %467 = vmatpush.xpose.msra.mxu0 0.0
    %468 = vmatpush.xpose.msra.mxu0 0.0
    %469 = vmatpush.xpose.msra.mxu0 0.0
    %470 = vmatpush.xpose.msra.mxu0 0.0
    %471 = vmatpush.xpose.msra.mxu0 %v454
    %472 = vmatmul.f32.gmra.mxu0 %v451
    %v473 = vpop.f32.mrf.mxu0
    %v474 = vadd.f32 0.0, %v473
    %475 = vdwg.mxu0
    %v477 = vsel %vm423, %v275, 0
    %v480 = vsel %vm423, %v347, 0
    %482 = vmatpush.xpose.msra.mxu0 0.0
    %483 = vmatpush.xpose.msra.mxu0 0.0
    %484 = vmatpush.xpose.msra.mxu0 0.0
    %485 = vmatpush.xpose.msra.mxu0 0.0
    %486 = vmatpush.xpose.msra.mxu0 0.0
    %487 = vmatpush.xpose.msra.mxu0 0.0
    %488 = vmatpush.xpose.msra.mxu0 0.0
    %489 = vmatpush.xpose.msra.mxu0 0.0
    %490 = vmatpush.xpose.msra.mxu0 0.0
    %491 = vmatpush.xpose.msra.mxu0 0.0
    %492 = vmatpush.xpose.msra.mxu0 0.0
    %493 = vmatpush.xpose.msra.mxu0 0.0
    %494 = vmatpush.xpose.msra.mxu0 0.0
    %495 = vmatpush.xpose.msra.mxu0 0.0
    %496 = vmatpush.xpose.msra.mxu0 0.0
    %497 = vmatpush.xpose.msra.mxu0 %v480
    %498 = vmatmul.f32.gmra.mxu0 %v477
    %v499 = vpop.f32.mrf.mxu0
    %v500 = vadd.f32 0.0, %v499
    %501 = vdwg.mxu0
    %v503 = vsel %vm423, %v277, 0
    %v506 = vsel %vm423, %v349, 0
    %508 = vmatpush.xpose.msra.mxu0 0.0
    %509 = vmatpush.xpose.msra.mxu0 0.0
    %510 = vmatpush.xpose.msra.mxu0 0.0
    %511 = vmatpush.xpose.msra.mxu0 0.0
    %512 = vmatpush.xpose.msra.mxu0 0.0
    %513 = vmatpush.xpose.msra.mxu0 0.0
    %514 = vmatpush.xpose.msra.mxu0 0.0
    %515 = vmatpush.xpose.msra.mxu0 0.0
    %516 = vmatpush.xpose.msra.mxu0 0.0
    %517 = vmatpush.xpose.msra.mxu0 0.0
    %518 = vmatpush.xpose.msra.mxu0 0.0
    %519 = vmatpush.xpose.msra.mxu0 0.0
    %520 = vmatpush.xpose.msra.mxu0 0.0
    %521 = vmatpush.xpose.msra.mxu0 0.0
    %522 = vmatpush.xpose.msra.mxu0 0.0
    %523 = vmatpush.xpose.msra.mxu0 %v506
    %524 = vmatmul.f32.gmra.mxu0 %v503
    %v525 = vpop.f32.mrf.mxu0
    %v526 = vadd.f32 0.0, %v525
    %527 = vdwg.mxu0
    %v528 = vmul.f32 %v448, 0.25
    %v529 = vmul.f32 %v474, 0.25
    %v530 = vmul.f32 %v500, 0.25
    %v531 = vmul.f32 %v526, 0.25
    %v532 = vperm.slane %v200, 0
    %v533 = vperm.slane %v202, 0
    %v534 = vperm.slane %v203, 0
    %v535 = vperm.slane %v204, 0
    %v540 = vadd.f32 %v528, %v532
    %v541 = vadd.f32 %v529, %v533
    %v542 = vadd.f32 %v530, %v534
    %v543 = vadd.f32 %v531, %v535
    %vm544 = vcmask 64512
    %v545 = vsel %vm544, %v540, -inf
    %546 = vmax.xlane.f32.xlu0 %v545
    %v547 = vpop.xlane.xlu0 %546
    %v548 = vsel %vm544, %v541, -inf
    %549 = vmax.xlane.f32.xlu0 %v548
    %v550 = vpop.xlane.xlu0 %549
    %v551 = vsel %vm544, %v542, -inf
    %552 = vmax.xlane.f32.xlu0 %v551
    %v553 = vpop.xlane.xlu0 %552
    %v554 = vsel %vm544, %v543, -inf
    %555 = vmax.xlane.f32.xlu0 %v554
    %v556 = vpop.xlane.xlu0 %555
    %v557 = vsub.f32 %v540, %v547
    %v558 = vsub.f32 %v541, %v550
    %v559 = vsub.f32 %v542, %v553
    %v560 = vsub.f32 %v543, %v556
    %v561 = vmul.f32 %v557, 1.442695
    %v562 = vpow.pop %v561
    %v563 = vmul.f32 %v558, 1.442695
    %v564 = vpow.pop %v563
    %v565 = vmul.f32 %v559, 1.442695
    %v566 = vpow.pop %v565
    %v567 = vmul.f32 %v560, 1.442695
    %v568 = vpow.pop %v567
    %v569 = vsel %vm544, %v562, 0.0
    %570 = vadd.xlane.f32.xlu0 %v569
    %v571 = vpop.xlane.xlu0 %570
    %v572 = vsel %vm544, %v564, 0.0
    %573 = vadd.xlane.f32.xlu0 %v572
    %v574 = vpop.xlane.xlu0 %573
    %v575 = vsel %vm544, %v566, 0.0
    %576 = vadd.xlane.f32.xlu0 %v575
    %v577 = vpop.xlane.xlu0 %576
    %v578 = vsel %vm544, %v568, 0.0
    %579 = vadd.xlane.f32.xlu0 %v578
    %v580 = vpop.xlane.xlu0 %579
    %v581 = vrcp.pop %v571
    %v582 = vrcp.pop %v574
    %v583 = vrcp.pop %v577
    %v584 = vrcp.pop %v580
    %v585 = vmul.f32 %v562, %v581
    %v586 = vmul.f32 %v564, %v582
    %v587 = vmul.f32 %v566, %v583
    %v588 = vmul.f32 %v568, %v584
    %v590 = vsel %vm544, %v585, 0
    %592 = vmatpush.msra.mxu0 0.0
    %593 = vmatpush.msra.mxu0 0.0
    %594 = vmatpush.msra.mxu0 0.0
    %595 = vmatpush.msra.mxu0 0.0
    %596 = vmatpush.msra.mxu0 0.0
    %597 = vmatpush.msra.mxu0 0.0
    %598 = vmatpush.msra.mxu0 0.0
    %599 = vmatpush.msra.mxu0 0.0
    %600 = vmatpush.msra.mxu0 0.0
    %601 = vmatpush.msra.mxu0 0.0
    %602 = vmatpush.msra.mxu0 0.0
    %603 = vmatpush.msra.mxu0 0.0
    %604 = vmatpush.msra.mxu0 0.0
    %605 = vmatpush.msra.mxu0 0.0
    %606 = vmatpush.msra.mxu0 0.0
    %607 = vmatpush.msra.mxu0 %v383
    %608 = vmatmul.f32.gmra.mxu0 %v590
    %v609 = vpop.f32.mrf.mxu0
    %v610 = vadd.f32 0.0, %v609
    %611 = vdwg.mxu0
    %v613 = vsel %vm544, %v586, 0
    %615 = vmatpush.msra.mxu0 0.0
    %616 = vmatpush.msra.mxu0 0.0
    %617 = vmatpush.msra.mxu0 0.0
    %618 = vmatpush.msra.mxu0 0.0
    %619 = vmatpush.msra.mxu0 0.0
    %620 = vmatpush.msra.mxu0 0.0
    %621 = vmatpush.msra.mxu0 0.0
    %622 = vmatpush.msra.mxu0 0.0
    %623 = vmatpush.msra.mxu0 0.0
    %624 = vmatpush.msra.mxu0 0.0
    %625 = vmatpush.msra.mxu0 0.0
    %626 = vmatpush.msra.mxu0 0.0
    %627 = vmatpush.msra.mxu0 0.0
    %628 = vmatpush.msra.mxu0 0.0
    %629 = vmatpush.msra.mxu0 0.0
    %630 = vmatpush.msra.mxu0 %v385
    %631 = vmatmul.f32.gmra.mxu0 %v613
    %v632 = vpop.f32.mrf.mxu0
    %v633 = vadd.f32 0.0, %v632
    %634 = vdwg.mxu0
    %v636 = vsel %vm544, %v587, 0
    %638 = vmatpush.msra.mxu0 0.0
    %639 = vmatpush.msra.mxu0 0.0
    %640 = vmatpush.msra.mxu0 0.0
    %641 = vmatpush.msra.mxu0 0.0
    %642 = vmatpush.msra.mxu0 0.0
    %643 = vmatpush.msra.mxu0 0.0
    %644 = vmatpush.msra.mxu0 0.0
    %645 = vmatpush.msra.mxu0 0.0
    %646 = vmatpush.msra.mxu0 0.0
    %647 = vmatpush.msra.mxu0 0.0
    %648 = vmatpush.msra.mxu0 0.0
    %649 = vmatpush.msra.mxu0 0.0
    %650 = vmatpush.msra.mxu0 0.0
    %651 = vmatpush.msra.mxu0 0.0
    %652 = vmatpush.msra.mxu0 0.0
    %653 = vmatpush.msra.mxu0 %v419
    %654 = vmatmul.f32.gmra.mxu0 %v636
    %v655 = vpop.f32.mrf.mxu0
    %v656 = vadd.f32 0.0, %v655
    %657 = vdwg.mxu0
    %v659 = vsel %vm544, %v588, 0
    %661 = vmatpush.msra.mxu0 0.0
    %662 = vmatpush.msra.mxu0 0.0
    %663 = vmatpush.msra.mxu0 0.0
    %664 = vmatpush.msra.mxu0 0.0
    %665 = vmatpush.msra.mxu0 0.0
    %666 = vmatpush.msra.mxu0 0.0
    %667 = vmatpush.msra.mxu0 0.0
    %668 = vmatpush.msra.mxu0 0.0
    %669 = vmatpush.msra.mxu0 0.0
    %670 = vmatpush.msra.mxu0 0.0
    %671 = vmatpush.msra.mxu0 0.0
    %672 = vmatpush.msra.mxu0 0.0
    %673 = vmatpush.msra.mxu0 0.0
    %674 = vmatpush.msra.mxu0 0.0
    %675 = vmatpush.msra.mxu0 0.0
    %676 = vmatpush.msra.mxu0 %v421
    %677 = vmatmul.f32.gmra.mxu0 %v659
    %v678 = vpop.f32.mrf.mxu0
    %v679 = vadd.f32 0.0, %v678
    %680 = vdwg.mxu0
    %v681 = vld [vmem:[%s8] sm:$0x1]
    %v682 = vpack.c.bf16 %v633, %v610
    %v683 = vld [vmem:[%s7] sm:$0xf]
    %v684 = vld [vmem:[%s7 + $0x4] sm:$0xf]
    %v687 = vunpack.c.l.b16 %v683
    %v688 = vunpack.c.l.b16 %v684
    %v689 = vpack.c.b16 %v688, %v687
    %v692 = vsel %vm423, %v682, 0
    %694 = vmatpush.bf16.msra.mxu0 0
    %695 = vmatpush.bf16.msra.mxu0 0
    %696 = vmatpush.bf16.msra.mxu0 0
    %697 = vmatpush.bf16.msra.mxu0 0
    %698 = vmatpush.bf16.msra.mxu0 0
    %699 = vmatpush.bf16.msra.mxu0 0
    %700 = vmatpush.bf16.msra.mxu0 0
    %701 = vmatpush.bf16.msra.mxu0 %v689
    %702 = vmatmul.bf16.gmra.mxu0 %v692
    %v703 = vpop.f32.mrf.mxu0
    %v704 = vadd.f32 0.0, %v703
    %v705 = vpop.f32.mrf.mxu0
    %v706 = vadd.f32 0.0, %v705
    %707 = vdwg.mxu0
    %v709 = vperm.slane %v681, 0
    %v711 = vadd.f32 %v709, %v704
    %v712 = vadd.f32 %v709, %v706
    %v713 = vpack.c.bf16 %v679, %v656
    %s714 = scalar_lea.vmem %s7, 8
    %v715 = vld [vmem:[%s714] sm:$0xf]
    %v716 = vld [vmem:[%s714 + $0x4] sm:$0xf]
    %v719 = vunpack.c.l.b16 %v715
    %v720 = vunpack.c.l.b16 %v716
    %v721 = vpack.c.b16 %v720, %v719
    %v724 = vsel %vm423, %v713, 0
    %726 = vmatpush.bf16.msra.mxu0 0
    %727 = vmatpush.bf16.msra.mxu0 0
    %728 = vmatpush.bf16.msra.mxu0 0
    %729 = vmatpush.bf16.msra.mxu0 0
    %730 = vmatpush.bf16.msra.mxu0 0
    %731 = vmatpush.bf16.msra.mxu0 0
    %732 = vmatpush.bf16.msra.mxu0 0
    %733 = vmatpush.bf16.msra.mxu0 %v721
    %734 = vmatmul.bf16.gmra.mxu0 %v724
    %v735 = vpop.f32.mrf.mxu0
    %v736 = vadd.f32 0.0, %v735
    %v737 = vpop.f32.mrf.mxu0
    %v738 = vadd.f32 0.0, %v737
    %739 = vdwg.mxu0
    %v740 = vadd.f32 %v711, %v736
    %v741 = vadd.f32 %v712, %v738
    %v742 = vadd.f32 %v190, %v740
    %v743 = vadd.f32 %v191, %v741
    %s744 = scalar_lea.vmem %s8, 1
    %v745 = vld [vmem:[%s744] sm:$0x1]
    %s746 = scalar_lea.vmem %s8, 2
    %v747 = vld [vmem:[%s746] sm:$0x1]
    %v748 = vsel %vm134, %v742, 0.0
    %749 = vadd.xlane.f32.xlu0 %v748
    %v750 = vpop.xlane.xlu0 %749
    %v751 = vsel %vm134, %v743, 0.0
    %752 = vadd.xlane.f32.xlu0 %v751
    %v753 = vpop.xlane.xlu0 %752
    %v754 = vmul.f32 %v750, %v147
    %v755 = vmul.f32 %v753, %v147
    %v756 = vsub.f32 %v742, %v754
    %v757 = vsub.f32 %v743, %v755
    %v758 = vmul.f32 %v756, %v756
    %v759 = vmul.f32 %v757, %v757
    %v760 = vsel %vm134, %v758, 0.0
    %761 = vadd.xlane.f32.xlu0 %v760
    %v762 = vpop.xlane.xlu0 %761
    %v763 = vsel %vm134, %v759, 0.0
    %764 = vadd.xlane.f32.xlu0 %v763
    %v765 = vpop.xlane.xlu0 %764
    %v766 = vmul.f32 %v762, %v147
    %v767 = vmul.f32 %v765, %v147
    %v768 = vadd.f32 %v766, 1e-12
    %v769 = vadd.f32 %v767, 1e-12
    %v770 = vrsqrt.pop %v768
    %v771 = vmul.f32 %v770, %v768
    %v772 = vmul.f32 %v771, %v770
    %v773 = vmul.f32 0.5, %v772
    %v774 = vsub.f32 1.5, %v773
    %v775 = vmul.f32 %v770, %v774
    %vm776 = vweird.f32 %v768
    %vm777 = vweird.f32 %v770
    %vm778 = vmor %vm776, %vm777
    %v779 = vsel %vm778, %v770, %v775
    %v780 = vrsqrt.pop %v769
    %v781 = vmul.f32 %v780, %v769
    %v782 = vmul.f32 %v781, %v780
    %v783 = vmul.f32 0.5, %v782
    %v784 = vsub.f32 1.5, %v783
    %v785 = vmul.f32 %v780, %v784
    %vm786 = vweird.f32 %v769
    %vm787 = vweird.f32 %v780
    %vm788 = vmor %vm786, %vm787
    %v789 = vsel %vm788, %v780, %v785
    %v790 = vmul.f32 %v756, %v779
    %v791 = vmul.f32 %v757, %v789
    %v793 = vperm.slane %v745, 0
    %v795 = vmul.f32 %v790, %v793
    %v796 = vmul.f32 %v791, %v793
    %v798 = vperm.slane %v747, 0
    %v800 = vadd.f32 %v795, %v798
    %v801 = vadd.f32 %v796, %v798
    %v802 = vpack.c.bf16 %v801, %v800
    %v803 = vld [vmem:[%s9] sm:$0xf]
    %v804 = vld [vmem:[%s9 + $0x4] sm:$0xf]
    %v805 = vld [vmem:[%s9 + $0x8] sm:$0xf]
    %v806 = vld [vmem:[%s9 + $0xc] sm:$0xf]
    %v807 = vld [vmem:[%s10] sm:$0x1]
    %v809 = vperm.slane %v807, 0
    %v815 = vunpack.c.l.b16 %v803
    %v816 = vunpack.c.l.b16 %v804
    %v817 = vunpack.c.l.b16 %v805
    %v818 = vunpack.c.l.b16 %v806
    %v819 = vpack.c.b16 %v816, %v815
    %v820 = vpack.c.b16 %v818, %v817
    %v824 = vsel %vm134, %v802, 0
    %826 = vmatpush.bf16.msra.mxu0 0
    %827 = vmatpush.bf16.msra.mxu0 0
    %828 = vmatpush.bf16.msra.mxu0 0
    %829 = vmatpush.bf16.msra.mxu0 0
    %830 = vmatpush.bf16.msra.mxu0 0
    %831 = vmatpush.bf16.msra.mxu0 0
    %832 = vmatpush.bf16.msra.mxu0 %v820
    %833 = vmatpush.bf16.msra.mxu0 %v819
    %834 = vmatmul.bf16.gmra.mxu0 %v824
    %v835 = vpop.f32.mrf.mxu0
    %v836 = vadd.f32 %v809, %v835
    %v837 = vpop.f32.mrf.mxu0
    %v838 = vadd.f32 %v809, %v837
    %839 = vdwg.mxu0
    %v840 = vmul.f32 %v836, 0.5
    %v841 = vmul.f32 %v838, 0.5
    %v842 = vmul.f32 %v836, 0.044715
    %v843 = vmul.f32 %v838, 0.044715
    %v844 = vmul.f32 %v842, %v836
    %v845 = vmul.f32 %v843, %v838
    %v846 = vmul.f32 %v844, %v836
    %v847 = vmul.f32 %v845, %v838
    %v848 = vadd.f32 %v836, %v846
    %v849 = vadd.f32 %v838, %v847
    %v850 = vmul.f32 %v848, 0.7978846
    %v851 = vmul.f32 %v849, 0.7978846
    %v852 = vtanh.pop %v850
    %v853 = vtanh.pop %v851
    %v854 = vadd.f32 %v852, 1.0
    %v855 = vadd.f32 %v853, 1.0
    %v856 = vmul.f32 %v840, %v854
    %v857 = vmul.f32 %v841, %v855
    %v858 = vpack.c.bf16 %v857, %v856
    %v859 = vld [vmem:[%s11] sm:$0xf]
    %v860 = vld [vmem:[%s11 + $0x4] sm:$0xf]
    %v861 = vld [vmem:[%s11 + $0x8] sm:$0xf]
    %v862 = vld [vmem:[%s11 + $0xc] sm:$0xf]
    %v863 = vld [vmem:[%s11 + $0x10] sm:$0xf]
    %v864 = vld [vmem:[%s11 + $0x14] sm:$0xf]
    %v865 = vld [vmem:[%s11 + $0x18] sm:$0xf]
    %v866 = vld [vmem:[%s11 + $0x1c] sm:$0xf]
    %s867 = scalar_lea.vmem %s8, 3
    %v868 = vld [vmem:[%s867] sm:$0x1]
    %v870 = vperm.slane %v868, 0
    %v880 = vunpack.c.l.b16 %v859
    %v881 = vunpack.c.l.b16 %v860
    %v882 = vunpack.c.l.b16 %v861
    %v883 = vunpack.c.l.b16 %v862
    %v884 = vunpack.c.l.b16 %v863
    %v885 = vunpack.c.l.b16 %v864
    %v886 = vunpack.c.l.b16 %v865
    %v887 = vunpack.c.l.b16 %v866
    %v888 = vpack.c.b16 %v881, %v880
    %v889 = vpack.c.b16 %v883, %v882
    %v890 = vpack.c.b16 %v885, %v884
    %v891 = vpack.c.b16 %v887, %v886
    %vm896 = vcmask 523264
    %v898 = vsel %vm896, %v858, 0
    %900 = vmatpush.bf16.msra.mxu0 0
    %901 = vmatpush.bf16.msra.mxu0 0
    %902 = vmatpush.bf16.msra.mxu0 0
    %903 = vmatpush.bf16.msra.mxu0 0
    %904 = vmatpush.bf16.msra.mxu0 %v891
    %905 = vmatpush.bf16.msra.mxu0 %v890
    %906 = vmatpush.bf16.msra.mxu0 %v889
    %907 = vmatpush.bf16.msra.mxu0 %v888
    %908 = vmatmul.bf16.gmra.mxu0 %v898
    %v909 = vpop.f32.mrf.mxu0
    %v910 = vadd.f32 %v870, %v909
    %v911 = vpop.f32.mrf.mxu0
    %v912 = vadd.f32 %v870, %v911
    %913 = vdwg.mxu0
    %v914 = vadd.f32 %v800, %v910
    %v915 = vadd.f32 %v801, %v912
    %s916 = scalar_lea.vmem %s8, 4
    %v917 = vld [vmem:[%s916] sm:$0x1]
    %s918 = scalar_lea.vmem %s8, 5
    %v919 = vld [vmem:[%s918] sm:$0x1]
    %v920 = vsel %vm134, %v914, 0.0
    %921 = vadd.xlane.f32.xlu0 %v920
    %v922 = vpop.xlane.xlu0 %921
    %v923 = vsel %vm134, %v915, 0.0
    %924 = vadd.xlane.f32.xlu0 %v923
    %v925 = vpop.xlane.xlu0 %924
    %v926 = vmul.f32 %v922, %v147
    %v927 = vmul.f32 %v925, %v147
    %v928 = vsub.f32 %v914, %v926
    %v929 = vsub.f32 %v915, %v927
    %v930 = vmul.f32 %v928, %v928
    %v931 = vmul.f32 %v929, %v929
    %v932 = vsel %vm134, %v930, 0.0
    %933 = vadd.xlane.f32.xlu0 %v932
    %v934 = vpop.xlane.xlu0 %933
    %v935 = vsel %vm134, %v931, 0.0
    %936 = vadd.xlane.f32.xlu0 %v935
    %v937 = vpop.xlane.xlu0 %936
    %v938 = vmul.f32 %v934, %v147
    %v939 = vmul.f32 %v937, %v147
    %v940 = vadd.f32 %v938, 1e-12
    %v941 = vadd.f32 %v939, 1e-12
    %v942 = vrsqrt.pop %v940
    %v943 = vmul.f32 %v942, %v940
    %v944 = vmul.f32 %v943, %v942
    %v945 = vmul.f32 0.5, %v944
    %v946 = vsub.f32 1.5, %v945
    %v947 = vmul.f32 %v942, %v946
    %vm948 = vweird.f32 %v940
    %vm949 = vweird.f32 %v942
    %vm950 = vmor %vm948, %vm949
    %v951 = vsel %vm950, %v942, %v947
    %v952 = vrsqrt.pop %v941
    %v953 = vmul.f32 %v952, %v941
    %v954 = vmul.f32 %v953, %v952
    %v955 = vmul.f32 0.5, %v954
    %v956 = vsub.f32 1.5, %v955
    %v957 = vmul.f32 %v952, %v956
    %vm958 = vweird.f32 %v941
    %vm959 = vweird.f32 %v952
    %vm960 = vmor %vm958, %vm959
    %v961 = vsel %vm960, %v952, %v957
    %v962 = vmul.f32 %v928, %v951
    %v963 = vmul.f32 %v929, %v961
    %v965 = vperm.slane %v917, 0
    %v967 = vmul.f32 %v962, %v965
    %v968 = vmul.f32 %v963, %v965
    %v970 = vperm.slane %v919, 0
    %v972 = vadd.f32 %v967, %v970
    %v973 = vadd.f32 %v968, %v970
    %v974 = vpack.c.bf16 %v973, %v972
    %s975 = scalar_lea.vmem %s5, 32
    %v976 = vld [vmem:[%s975] sm:$0xf]
    %v977 = vld [vmem:[%s975 + $0x4] sm:$0xf]
    %v978 = vld [vmem:[%s975 + $0x8] sm:$0xf]
    %v979 = vld [vmem:[%s975 + $0xc] sm:$0xf]
    %s980 = scalar_lea.vmem %s6, 2
    %v981 = vld [vmem:[%s980] sm:$0x1]
    %v983 = vperm.slane %v981, 0
    %v989 = vunpack.c.l.b16 %v976
    %v990 = vunpack.c.l.b16 %v977
    %v991 = vunpack.c.l.b16 %v978
    %v992 = vunpack.c.l.b16 %v979
    %v993 = vpack.c.b16 %v990, %v989
    %v994 = vpack.c.b16 %v992, %v991
    %v998 = vsel %vm134, %v974, 0
    %1000 = vmatpush.bf16.msra.mxu0 0
    %1001 = vmatpush.bf16.msra.mxu0 0
    %1002 = vmatpush.bf16.msra.mxu0 0
    %1003 = vmatpush.bf16.msra.mxu0 0
    %1004 = vmatpush.bf16.msra.mxu0 0
    %1005 = vmatpush.bf16.msra.mxu0 0
    %1006 = vmatpush.bf16.msra.mxu0 %v994
    %1007 = vmatpush.bf16.msra.mxu0 %v993
    %1008 = vmatmul.bf16.gmra.mxu0 %v998
    %v1009 = vpop.f32.mrf.mxu0
    %v1010 = vadd.f32 %v983, %v1009
    %v1011 = vpop.f32.mrf.mxu0
    %v1012 = vadd.f32 %v983, %v1011
    %1013 = vdwg.mxu0
    %s1014 = scalar_lea.vmem %s5, 48
    %v1015 = vld [vmem:[%s1014] sm:$0xf]
    %v1016 = vld [vmem:[%s1014 + $0x4] sm:$0xf]
    %v1017 = vld [vmem:[%s1014 + $0x8] sm:$0xf]
    %v1018 = vld [vmem:[%s1014 + $0xc] sm:$0xf]
    %s1019 = scalar_lea.vmem %s6, 3
    %v1020 = vld [vmem:[%s1019] sm:$0x1]
    %v1022 = vperm.slane %v1020, 0
    %v1028 = vunpack.c.l.b16 %v1015
    %v1029 = vunpack.c.l.b16 %v1016
    %v1030 = vunpack.c.l.b16 %v1017
    %v1031 = vunpack.c.l.b16 %v1018
    %v1032 = vpack.c.b16 %v1029, %v1028
    %v1033 = vpack.c.b16 %v1031, %v1030
    %1036 = vmatpush.bf16.msra.mxu0 0
    %1037 = vmatpush.bf16.msra.mxu0 0
    %1038 = vmatpush.bf16.msra.mxu0 0
    %1039 = vmatpush.bf16.msra.mxu0 0
    %1040 = vmatpush.bf16.msra.mxu0 0
    %1041 = vmatpush.bf16.msra.mxu0 0
    %1042 = vmatpush.bf16.msra.mxu0 %v1033
    %1043 = vmatpush.bf16.msra.mxu0 %v1032
    %1044 = vmatmul.bf16.gmra.mxu0 %v998
    %v1045 = vpop.f32.mrf.mxu0
    %v1046 = vadd.f32 %v1022, %v1045
    %v1047 = vpop.f32.mrf.mxu0
    %v1048 = vadd.f32 %v1022, %v1047
    %1049 = vdwg.mxu0
    %s1050 = scalar_lea.vmem %s5, 96
    %v1051 = vld [vmem:[%s1050] sm:$0xf]
    %v1052 = vld [vmem:[%s1050 + $0x4] sm:$0xf]
    %v1053 = vld [vmem:[%s1050 + $0x8] sm:$0xf]
    %v1054 = vld [vmem:[%s1050 + $0xc] sm:$0xf]
    %s1055 = scalar_lea.vmem %s6, 6
    %v1056 = vld [vmem:[%s1055] sm:$0x1]
    %v1058 = vperm.slane %v1056, 0
    %v1064 = vunpack.c.l.b16 %v1051
    %v1065 = vunpack.c.l.b16 %v1052
    %v1066 = vunpack.c.l.b16 %v1053
    %v1067 = vunpack.c.l.b16 %v1054
    %v1068 = vpack.c.b16 %v1065, %v1064
    %v1069 = vpack.c.b16 %v1067, %v1066
    %1072 = vmatpush.bf16.msra.mxu0 0
    %1073 = vmatpush.bf16.msra.mxu0 0
    %1074 = vmatpush.bf16.msra.mxu0 0
    %1075 = vmatpush.bf16.msra.mxu0 0
    %1076 = vmatpush.bf16.msra.mxu0 0
    %1077 = vmatpush.bf16.msra.mxu0 0
    %1078 = vmatpush.bf16.msra.mxu0 %v1069
    %1079 = vmatpush.bf16.msra.mxu0 %v1068
    %1080 = vmatmul.bf16.gmra.mxu0 %v998
    %v1081 = vpop.f32.mrf.mxu0
    %v1082 = vadd.f32 %v1058, %v1081
    %v1083 = vpop.f32.mrf.mxu0
    %v1084 = vadd.f32 %v1058, %v1083
    %1085 = vdwg.mxu0
    %s1086 = scalar_lea.vmem %s5, 112
    %v1087 = vld [vmem:[%s1086] sm:$0xf]
    %v1088 = vld [vmem:[%s1086 + $0x4] sm:$0xf]
    %v1089 = vld [vmem:[%s1086 + $0x8] sm:$0xf]
    %v1090 = vld [vmem:[%s1086 + $0xc] sm:$0xf]
    %s1091 = scalar_lea.vmem %s6, 7
    %v1092 = vld [vmem:[%s1091] sm:$0x1]
    %v1094 = vperm.slane %v1092, 0
    %v1100 = vunpack.c.l.b16 %v1087
    %v1101 = vunpack.c.l.b16 %v1088
    %v1102 = vunpack.c.l.b16 %v1089
    %v1103 = vunpack.c.l.b16 %v1090
    %v1104 = vpack.c.b16 %v1101, %v1100
    %v1105 = vpack.c.b16 %v1103, %v1102
    %1108 = vmatpush.bf16.msra.mxu0 0
    %1109 = vmatpush.bf16.msra.mxu0 0
    %1110 = vmatpush.bf16.msra.mxu0 0
    %1111 = vmatpush.bf16.msra.mxu0 0
    %1112 = vmatpush.bf16.msra.mxu0 0
    %1113 = vmatpush.bf16.msra.mxu0 0
    %1114 = vmatpush.bf16.msra.mxu0 %v1105
    %1115 = vmatpush.bf16.msra.mxu0 %v1104
    %1116 = vmatmul.bf16.gmra.mxu0 %v998
    %v1117 = vpop.f32.mrf.mxu0
    %v1118 = vadd.f32 %v1094, %v1117
    %v1119 = vpop.f32.mrf.mxu0
    %v1120 = vadd.f32 %v1094, %v1119
    %1121 = vdwg.mxu0
    %s1122 = scalar_lea.vmem %s5, 160
    %v1123 = vld [vmem:[%s1122] sm:$0xf]
    %v1124 = vld [vmem:[%s1122 + $0x4] sm:$0xf]
    %v1125 = vld [vmem:[%s1122 + $0x8] sm:$0xf]
    %v1126 = vld [vmem:[%s1122 + $0xc] sm:$0xf]
    %s1127 = scalar_lea.vmem %s6, 10
    %v1128 = vld [vmem:[%s1127] sm:$0x1]
    %v1130 = vperm.slane %v1128, 0
    %v1136 = vunpack.c.l.b16 %v1123
    %v1137 = vunpack.c.l.b16 %v1124
    %v1138 = vunpack.c.l.b16 %v1125
    %v1139 = vunpack.c.l.b16 %v1126
    %v1140 = vpack.c.b16 %v1137, %v1136
    %v1141 = vpack.c.b16 %v1139, %v1138
    %1144 = vmatpush.bf16.msra.mxu0 0
    %1145 = vmatpush.bf16.msra.mxu0 0
    %1146 = vmatpush.bf16.msra.mxu0 0
    %1147 = vmatpush.bf16.msra.mxu0 0
    %1148 = vmatpush.bf16.msra.mxu0 0
    %1149 = vmatpush.bf16.msra.mxu0 0
    %1150 = vmatpush.bf16.msra.mxu0 %v1141
    %1151 = vmatpush.bf16.msra.mxu0 %v1140
    %1152 = vmatmul.bf16.gmra.mxu0 %v998
    %v1153 = vpop.f32.mrf.mxu0
    %v1154 = vadd.f32 %v1130, %v1153
    %v1155 = vpop.f32.mrf.mxu0
    %v1156 = vadd.f32 %v1130, %v1155
    %1157 = vdwg.mxu0
    %s1158 = scalar_lea.vmem %s5, 176
    %v1159 = vld [vmem:[%s1158] sm:$0xf]
    %v1160 = vld [vmem:[%s1158 + $0x4] sm:$0xf]
    %v1161 = vld [vmem:[%s1158 + $0x8] sm:$0xf]
    %v1162 = vld [vmem:[%s1158 + $0xc] sm:$0xf]
    %s1163 = scalar_lea.vmem %s6, 11
    %v1164 = vld [vmem:[%s1163] sm:$0x1]
    %v1166 = vperm.slane %v1164, 0
    %v1172 = vunpack.c.l.b16 %v1159
    %v1173 = vunpack.c.l.b16 %v1160
    %v1174 = vunpack.c.l.b16 %v1161
    %v1175 = vunpack.c.l.b16 %v1162
    %v1176 = vpack.c.b16 %v1173, %v1172
    %v1177 = vpack.c.b16 %v1175, %v1174
    %1180 = vmatpush.bf16.msra.mxu0 0
    %1181 = vmatpush.bf16.msra.mxu0 0
    %1182 = vmatpush.bf16.msra.mxu0 0
    %1183 = vmatpush.bf16.msra.mxu0 0
    %1184 = vmatpush.bf16.msra.mxu0 0
    %1185 = vmatpush.bf16.msra.mxu0 0
    %1186 = vmatpush.bf16.msra.mxu0 %v1177
    %1187 = vmatpush.bf16.msra.mxu0 %v1176
    %1188 = vmatmul.bf16.gmra.mxu0 %v998
    %v1189 = vpop.f32.mrf.mxu0
    %v1190 = vadd.f32 %v1166, %v1189
    %v1191 = vpop.f32.mrf.mxu0
    %v1192 = vadd.f32 %v1166, %v1191
    %1193 = vdwg.mxu0
    %v1195 = vsel %vm423, %v1010, 0
    %v1198 = vsel %vm423, %v1082, 0
    %1200 = vmatpush.xpose.msra.mxu0 0.0
    %1201 = vmatpush.xpose.msra.mxu0 0.0
    %1202 = vmatpush.xpose.msra.mxu0 0.0
    %1203 = vmatpush.xpose.msra.mxu0 0.0
    %1204 = vmatpush.xpose.msra.mxu0 0.0
    %1205 = vmatpush.xpose.msra.mxu0 0.0
    %1206 = vmatpush.xpose.msra.mxu0 0.0
    %1207 = vmatpush.xpose.msra.mxu0 0.0
    %1208 = vmatpush.xpose.msra.mxu0 0.0
    %1209 = vmatpush.xpose.msra.mxu0 0.0
    %1210 = vmatpush.xpose.msra.mxu0 0.0
    %1211 = vmatpush.xpose.msra.mxu0 0.0
    %1212 = vmatpush.xpose.msra.mxu0 0.0
    %1213 = vmatpush.xpose.msra.mxu0 0.0
    %1214 = vmatpush.xpose.msra.mxu0 0.0
    %1215 = vmatpush.xpose.msra.mxu0 %v1198
    %1216 = vmatmul.f32.gmra.mxu0 %v1195
    %v1217 = vpop.f32.mrf.mxu0
    %v1218 = vadd.f32 0.0, %v1217
    %1219 = vdwg.mxu0
    %v1221 = vsel %vm423, %v1012, 0
    %v1224 = vsel %vm423, %v1084, 0
    %1226 = vmatpush.xpose.msra.mxu0 0.0
    %1227 = vmatpush.xpose.msra.mxu0 0.0
    %1228 = vmatpush.xpose.msra.mxu0 0.0
    %1229 = vmatpush.xpose.msra.mxu0 0.0
    %1230 = vmatpush.xpose.msra.mxu0 0.0
    %1231 = vmatpush.xpose.msra.mxu0 0.0
    %1232 = vmatpush.xpose.msra.mxu0 0.0
    %1233 = vmatpush.xpose.msra.mxu0 0.0
    %1234 = vmatpush.xpose.msra.mxu0 0.0
    %1235 = vmatpush.xpose.msra.mxu0 0.0
    %1236 = vmatpush.xpose.msra.mxu0 0.0
    %1237 = vmatpush.xpose.msra.mxu0 0.0
    %1238 = vmatpush.xpose.msra.mxu0 0.0
    %1239 = vmatpush.xpose.msra.mxu0 0.0
    %1240 = vmatpush.xpose.msra.mxu0 0.0
    %1241 = vmatpush.xpose.msra.mxu0 %v1224
    %1242 = vmatmul.f32.gmra.mxu0 %v1221
    %v1243 = vpop.f32.mrf.mxu0
    %v1244 = vadd.f32 0.0, %v1243
    %1245 = vdwg.mxu0
    %v1247 = vsel %vm423, %v1046, 0
    %v1250 = vsel %vm423, %v1118, 0
    %1252 = vmatpush.xpose.msra.mxu0 0.0
    %1253 = vmatpush.xpose.msra.mxu0 0.0
    %1254 = vmatpush.xpose.msra.mxu0 0.0
    %1255 = vmatpush.xpose.msra.mxu0 0.0
    %1256 = vmatpush.xpose.msra.mxu0 0.0
    %1257 = vmatpush.xpose.msra.mxu0 0.0
    %1258 = vmatpush.xpose.msra.mxu0 0.0
    %1259 = vmatpush.xpose.msra.mxu0 0.0
    %1260 = vmatpush.xpose.msra.mxu0 0.0
    %1261 = vmatpush.xpose.msra.mxu0 0.0
    %1262 = vmatpush.xpose.msra.mxu0 0.0
    %1263 = vmatpush.xpose.msra.mxu0 0.0
    %1264 = vmatpush.xpose.msra.mxu0 0.0
    %1265 = vmatpush.xpose.msra.mxu0 0.0
    %1266 = vmatpush.xpose.msra.mxu0 0.0
    %1267 = vmatpush.xpose.msra.mxu0 %v1250
    %1268 = vmatmul.f32.gmra.mxu0 %v1247
    %v1269 = vpop.f32.mrf.mxu0
    %v1270 = vadd.f32 0.0, %v1269
    %1271 = vdwg.mxu0
    %v1273 = vsel %vm423, %v1048, 0
    %v1276 = vsel %vm423, %v1120, 0
    %1278 = vmatpush.xpose.msra.mxu0 0.0
    %1279 = vmatpush.xpose.msra.mxu0 0.0
    %1280 = vmatpush.xpose.msra.mxu0 0.0
    %1281 = vmatpush.xpose.msra.mxu0 0.0
    %1282 = vmatpush.xpose.msra.mxu0 0.0
    %1283 = vmatpush.xpose.msra.mxu0 0.0
    %1284 = vmatpush.xpose.msra.mxu0 0.0
    %1285 = vmatpush.xpose.msra.mxu0 0.0
    %1286 = vmatpush.xpose.msra.mxu0 0.0
    %1287 = vmatpush.xpose.msra.mxu0 0.0
    %1288 = vmatpush.xpose.msra.mxu0 0.0
    %1289 = vmatpush.xpose.msra.mxu0 0.0
    %1290 = vmatpush.xpose.msra.mxu0 0.0
    %1291 = vmatpush.xpose.msra.mxu0 0.0
    %1292 = vmatpush.xpose.msra.mxu0 0.0
    %1293 = vmatpush.xpose.msra.mxu0 %v1276
    %1294 = vmatmul.f32.gmra.mxu0 %v1273
    %v1295 = vpop.f32.mrf.mxu0
    %v1296 = vadd.f32 0.0, %v1295
    %1297 = vdwg.mxu0
    %v1298 = vmul.f32 %v1218, 0.25
    %v1299 = vmul.f32 %v1244, 0.25
    %v1300 = vmul.f32 %v1270, 0.25
    %v1301 = vmul.f32 %v1296, 0.25
    %v1302 = vadd.f32 %v1298, %v532
    %v1303 = vadd.f32 %v1299, %v533
    %v1304 = vadd.f32 %v1300, %v534
    %v1305 = vadd.f32 %v1301, %v535
    %v1306 = vsel %vm544, %v1302, -inf
    %1307 = vmax.xlane.f32.xlu0 %v1306
    %v1308 = vpop.xlane.xlu0 %1307
    %v1309 = vsel %vm544, %v1303, -inf
    %1310 = vmax.xlane.f32.xlu0 %v1309
    %v1311 = vpop.xlane.xlu0 %1310
    %v1312 = vsel %vm544, %v1304, -inf
    %1313 = vmax.xlane.f32.xlu0 %v1312
    %v1314 = vpop.xlane.xlu0 %1313
    %v1315 = vsel %vm544, %v1305, -inf
    %1316 = vmax.xlane.f32.xlu0 %v1315
    %v1317 = vpop.xlane.xlu0 %1316
    %v1318 = vsub.f32 %v1302, %v1308
    %v1319 = vsub.f32 %v1303, %v1311
    %v1320 = vsub.f32 %v1304, %v1314
    %v1321 = vsub.f32 %v1305, %v1317
    %v1322 = vmul.f32 %v1318, 1.442695
    %v1323 = vpow.pop %v1322
    %v1324 = vmul.f32 %v1319, 1.442695
    %v1325 = vpow.pop %v1324
    %v1326 = vmul.f32 %v1320, 1.442695
    %v1327 = vpow.pop %v1326
    %v1328 = vmul.f32 %v1321, 1.442695
    %v1329 = vpow.pop %v1328
    %v1330 = vsel %vm544, %v1323, 0.0
    %1331 = vadd.xlane.f32.xlu0 %v1330
    %v1332 = vpop.xlane.xlu0 %1331
    %v1333 = vsel %vm544, %v1325, 0.0
    %1334 = vadd.xlane.f32.xlu0 %v1333
    %v1335 = vpop.xlane.xlu0 %1334
    %v1336 = vsel %vm544, %v1327, 0.0
    %1337 = vadd.xlane.f32.xlu0 %v1336
    %v1338 = vpop.xlane.xlu0 %1337
    %v1339 = vsel %vm544, %v1329, 0.0
    %1340 = vadd.xlane.f32.xlu0 %v1339
    %v1341 = vpop.xlane.xlu0 %1340
    %v1342 = vrcp.pop %v1332
    %v1343 = vrcp.pop %v1335
    %v1344 = vrcp.pop %v1338
    %v1345 = vrcp.pop %v1341
    %v1346 = vmul.f32 %v1323, %v1342
    %v1347 = vmul.f32 %v1325, %v1343
    %v1348 = vmul.f32 %v1327, %v1344
    %v1349 = vmul.f32 %v1329, %v1345
    %v1351 = vsel %vm544, %v1346, 0
    %1353 = vmatpush.msra.mxu0 0.0
    %1354 = vmatpush.msra.mxu0 0.0
    %1355 = vmatpush.msra.mxu0 0.0
    %1356 = vmatpush.msra.mxu0 0.0
    %1357 = vmatpush.msra.mxu0 0.0
    %1358 = vmatpush.msra.mxu0 0.0
    %1359 = vmatpush.msra.mxu0 0.0
    %1360 = vmatpush.msra.mxu0 0.0
    %1361 = vmatpush.msra.mxu0 0.0
    %1362 = vmatpush.msra.mxu0 0.0
    %1363 = vmatpush.msra.mxu0 0.0
    %1364 = vmatpush.msra.mxu0 0.0
    %1365 = vmatpush.msra.mxu0 0.0
    %1366 = vmatpush.msra.mxu0 0.0
    %1367 = vmatpush.msra.mxu0 0.0
    %1368 = vmatpush.msra.mxu0 %v1154
    %1369 = vmatmul.f32.gmra.mxu0 %v1351
    %v1370 = vpop.f32.mrf.mxu0
    %v1371 = vadd.f32 0.0, %v1370
    %1372 = vdwg.mxu0
    %v1374 = vsel %vm544, %v1347, 0
    %1376 = vmatpush.msra.mxu0 0.0
    %1377 = vmatpush.msra.mxu0 0.0
    %1378 = vmatpush.msra.mxu0 0.0
    %1379 = vmatpush.msra.mxu0 0.0
    %1380 = vmatpush.msra.mxu0 0.0
    %1381 = vmatpush.msra.mxu0 0.0
    %1382 = vmatpush.msra.mxu0 0.0
    %1383 = vmatpush.msra.mxu0 0.0
    %1384 = vmatpush.msra.mxu0 0.0
    %1385 = vmatpush.msra.mxu0 0.0
    %1386 = vmatpush.msra.mxu0 0.0
    %1387 = vmatpush.msra.mxu0 0.0
    %1388 = vmatpush.msra.mxu0 0.0
    %1389 = vmatpush.msra.mxu0 0.0
    %1390 = vmatpush.msra.mxu0 0.0
    %1391 = vmatpush.msra.mxu0 %v1156
    %1392 = vmatmul.f32.gmra.mxu0 %v1374
    %v1393 = vpop.f32.mrf.mxu0
    %v1394 = vadd.f32 0.0, %v1393
    %1395 = vdwg.mxu0
    %v1397 = vsel %vm544, %v1348, 0
    %1399 = vmatpush.msra.mxu0 0.0
    %1400 = vmatpush.msra.mxu0 0.0
    %1401 = vmatpush.msra.mxu0 0.0
    %1402 = vmatpush.msra.mxu0 0.0
    %1403 = vmatpush.msra.mxu0 0.0
    %1404 = vmatpush.msra.mxu0 0.0
    %1405 = vmatpush.msra.mxu0 0.0
    %1406 = vmatpush.msra.mxu0 0.0
    %1407 = vmatpush.msra.mxu0 0.0
    %1408 = vmatpush.msra.mxu0 0.0
    %1409 = vmatpush.msra.mxu0 0.0
    %1410 = vmatpush.msra.mxu0 0.0
    %1411 = vmatpush.msra.mxu0 0.0
    %1412 = vmatpush.msra.mxu0 0.0
    %1413 = vmatpush.msra.mxu0 0.0
    %1414 = vmatpush.msra.mxu0 %v1190
    %1415 = vmatmul.f32.gmra.mxu0 %v1397
    %v1416 = vpop.f32.mrf.mxu0
    %v1417 = vadd.f32 0.0, %v1416
    %1418 = vdwg.mxu0
    %v1420 = vsel %vm544, %v1349, 0
    %1422 = vmatpush.msra.mxu0 0.0
    %1423 = vmatpush.msra.mxu0 0.0
    %1424 = vmatpush.msra.mxu0 0.0
    %1425 = vmatpush.msra.mxu0 0.0
    %1426 = vmatpush.msra.mxu0 0.0
    %1427 = vmatpush.msra.mxu0 0.0
    %1428 = vmatpush.msra.mxu0 0.0
    %1429 = vmatpush.msra.mxu0 0.0
    %1430 = vmatpush.msra.mxu0 0.0
    %1431 = vmatpush.msra.mxu0 0.0
    %1432 = vmatpush.msra.mxu0 0.0
    %1433 = vmatpush.msra.mxu0 0.0
    %1434 = vmatpush.msra.mxu0 0.0
    %1435 = vmatpush.msra.mxu0 0.0
    %1436 = vmatpush.msra.mxu0 0.0
    %1437 = vmatpush.msra.mxu0 %v1192
    %1438 = vmatmul.f32.gmra.mxu0 %v1420
    %v1439 = vpop.f32.mrf.mxu0
    %v1440 = vadd.f32 0.0, %v1439
    %1441 = vdwg.mxu0
    %s1442 = scalar_lea.vmem %s8, 6
    %v1443 = vld [vmem:[%s1442] sm:$0x1]
    %v1444 = vpack.c.bf16 %v1394, %v1371
    %s1445 = scalar_lea.vmem %s7, 16
    %v1446 = vld [vmem:[%s1445] sm:$0xf]
    %v1447 = vld [vmem:[%s1445 + $0x4] sm:$0xf]
    %v1450 = vunpack.c.l.b16 %v1446
    %v1451 = vunpack.c.l.b16 %v1447
    %v1452 = vpack.c.b16 %v1451, %v1450
    %v1455 = vsel %vm423, %v1444, 0
    %1457 = vmatpush.bf16.msra.mxu0 0
    %1458 = vmatpush.bf16.msra.mxu0 0
    %1459 = vmatpush.bf16.msra.mxu0 0
    %1460 = vmatpush.bf16.msra.mxu0 0
    %1461 = vmatpush.bf16.msra.mxu0 0
    %1462 = vmatpush.bf16.msra.mxu0 0
    %1463 = vmatpush.bf16.msra.mxu0 0
    %1464 = vmatpush.bf16.msra.mxu0 %v1452
    %1465 = vmatmul.bf16.gmra.mxu0 %v1455
    %v1466 = vpop.f32.mrf.mxu0
    %v1467 = vadd.f32 0.0, %v1466
    %v1468 = vpop.f32.mrf.mxu0
    %v1469 = vadd.f32 0.0, %v1468
    %1470 = vdwg.mxu0
    %v1472 = vperm.slane %v1443, 0
    %v1474 = vadd.f32 %v1472, %v1467
    %v1475 = vadd.f32 %v1472, %v1469
    %v1476 = vpack.c.bf16 %v1440, %v1417
    %s1477 = scalar_lea.vmem %s7, 24
    %v1478 = vld [vmem:[%s1477] sm:$0xf]
    %v1479 = vld [vmem:[%s1477 + $0x4] sm:$0xf]
    %v1482 = vunpack.c.l.b16 %v1478
    %v1483 = vunpack.c.l.b16 %v1479
    %v1484 = vpack.c.b16 %v1483, %v1482
    %v1487 = vsel %vm423, %v1476, 0
    %1489 = vmatpush.bf16.msra.mxu0 0
    %1490 = vmatpush.bf16.msra.mxu0 0
    %1491 = vmatpush.bf16.msra.mxu0 0
    %1492 = vmatpush.bf16.msra.mxu0 0
    %1493 = vmatpush.bf16.msra.mxu0 0
    %1494 = vmatpush.bf16.msra.mxu0 0
    %1495 = vmatpush.bf16.msra.mxu0 0
    %1496 = vmatpush.bf16.msra.mxu0 %v1484
    %1497 = vmatmul.bf16.gmra.mxu0 %v1487
    %v1498 = vpop.f32.mrf.mxu0
    %v1499 = vadd.f32 0.0, %v1498
    %v1500 = vpop.f32.mrf.mxu0
    %v1501 = vadd.f32 0.0, %v1500
    %1502 = vdwg.mxu0
    %v1503 = vadd.f32 %v1474, %v1499
    %v1504 = vadd.f32 %v1475, %v1501
    %v1505 = vadd.f32 %v972, %v1503
    %v1506 = vadd.f32 %v973, %v1504
    %s1507 = scalar_lea.vmem %s8, 7
    %v1508 = vld [vmem:[%s1507] sm:$0x1]
    %s1509 = scalar_lea.vmem %s8, 8
    %v1510 = vld [vmem:[%s1509] sm:$0x1]
    %v1511 = vsel %vm134, %v1505, 0.0
    %1512 = vadd.xlane.f32.xlu0 %v1511
    %v1513 = vpop.xlane.xlu0 %1512
    %v1514 = vsel %vm134, %v1506, 0.0
    %1515 = vadd.xlane.f32.xlu0 %v1514
    %v1516 = vpop.xlane.xlu0 %1515
    %v1517 = vmul.f32 %v1513, %v147
    %v1518 = vmul.f32 %v1516, %v147
    %v1519 = vsub.f32 %v1505, %v1517
    %v1520 = vsub.f32 %v1506, %v1518
    %v1521 = vmul.f32 %v1519, %v1519
    %v1522 = vmul.f32 %v1520, %v1520
    %v1523 = vsel %vm134, %v1521, 0.0
    %1524 = vadd.xlane.f32.xlu0 %v1523
    %v1525 = vpop.xlane.xlu0 %1524
    %v1526 = vsel %vm134, %v1522, 0.0
    %1527 = vadd.xlane.f32.xlu0 %v1526
    %v1528 = vpop.xlane.xlu0 %1527
    %v1529 = vmul.f32 %v1525, %v147
    %v1530 = vmul.f32 %v1528, %v147
    %v1531 = vadd.f32 %v1529, 1e-12
    %v1532 = vadd.f32 %v1530, 1e-12
    %v1533 = vrsqrt.pop %v1531
    %v1534 = vmul.f32 %v1533, %v1531
    %v1535 = vmul.f32 %v1534, %v1533
    %v1536 = vmul.f32 0.5, %v1535
    %v1537 = vsub.f32 1.5, %v1536
    %v1538 = vmul.f32 %v1533, %v1537
    %vm1539 = vweird.f32 %v1531
    %vm1540 = vweird.f32 %v1533
    %vm1541 = vmor %vm1539, %vm1540
    %v1542 = vsel %vm1541, %v1533, %v1538
    %v1543 = vrsqrt.pop %v1532
    %v1544 = vmul.f32 %v1543, %v1532
    %v1545 = vmul.f32 %v1544, %v1543
    %v1546 = vmul.f32 0.5, %v1545
    %v1547 = vsub.f32 1.5, %v1546
    %v1548 = vmul.f32 %v1543, %v1547
    %vm1549 = vweird.f32 %v1532
    %vm1550 = vweird.f32 %v1543
    %vm1551 = vmor %vm1549, %vm1550
    %v1552 = vsel %vm1551, %v1543, %v1548
    %v1553 = vmul.f32 %v1519, %v1542
    %v1554 = vmul.f32 %v1520, %v1552
    %v1556 = vperm.slane %v1508, 0
    %v1558 = vmul.f32 %v1553, %v1556
    %v1559 = vmul.f32 %v1554, %v1556
    %v1561 = vperm.slane %v1510, 0
    %v1563 = vadd.f32 %v1558, %v1561
    %v1564 = vadd.f32 %v1559, %v1561
    %v1565 = vpack.c.bf16 %v1564, %v1563
    %s1566 = scalar_lea.vmem %s9, 16
    %v1567 = vld [vmem:[%s1566] sm:$0xf]
    %v1568 = vld [vmem:[%s1566 + $0x4] sm:$0xf]
    %v1569 = vld [vmem:[%s1566 + $0x8] sm:$0xf]
    %v1570 = vld [vmem:[%s1566 + $0xc] sm:$0xf]
    %s1571 = scalar_lea.vmem %s10, 1
    %v1572 = vld [vmem:[%s1571] sm:$0x1]
    %v1574 = vperm.slane %v1572, 0
    %v1580 = vunpack.c.l.b16 %v1567
    %v1581 = vunpack.c.l.b16 %v1568
    %v1582 = vunpack.c.l.b16 %v1569
    %v1583 = vunpack.c.l.b16 %v1570
    %v1584 = vpack.c.b16 %v1581, %v1580
    %v1585 = vpack.c.b16 %v1583, %v1582
    %v1589 = vsel %vm134, %v1565, 0
    %1591 = vmatpush.bf16.msra.mxu0 0
    %1592 = vmatpush.bf16.msra.mxu0 0
    %1593 = vmatpush.bf16.msra.mxu0 0
    %1594 = vmatpush.bf16.msra.mxu0 0
    %1595 = vmatpush.bf16.msra.mxu0 0
    %1596 = vmatpush.bf16.msra.mxu0 0
    %1597 = vmatpush.bf16.msra.mxu0 %v1585
    %1598 = vmatpush.bf16.msra.mxu0 %v1584
    %1599 = vmatmul.bf16.gmra.mxu0 %v1589
    %v1600 = vpop.f32.mrf.mxu0
    %v1601 = vadd.f32 %v1574, %v1600
    %v1602 = vpop.f32.mrf.mxu0
    %v1603 = vadd.f32 %v1574, %v1602
    %1604 = vdwg.mxu0
    %v1605 = vmul.f32 %v1601, 0.5
    %v1606 = vmul.f32 %v1603, 0.5
    %v1607 = vmul.f32 %v1601, 0.044715
    %v1608 = vmul.f32 %v1603, 0.044715
    %v1609 = vmul.f32 %v1607, %v1601
    %v1610 = vmul.f32 %v1608, %v1603
    %v1611 = vmul.f32 %v1609, %v1601
    %v1612 = vmul.f32 %v1610, %v1603
    %v1613 = vadd.f32 %v1601, %v1611
    %v1614 = vadd.f32 %v1603, %v1612
    %v1615 = vmul.f32 %v1613, 0.7978846
    %v1616 = vmul.f32 %v1614, 0.7978846
    %v1617 = vtanh.pop %v1615
    %v1618 = vtanh.pop %v1616
    %v1619 = vadd.f32 %v1617, 1.0
    %v1620 = vadd.f32 %v1618, 1.0
    %v1621 = vmul.f32 %v1605, %v1619
    %v1622 = vmul.f32 %v1606, %v1620
    %v1623 = vpack.c.bf16 %v1622, %v1621
    %s1624 = scalar_lea.vmem %s11, 32
    %v1625 = vld [vmem:[%s1624] sm:$0xf]
    %v1626 = vld [vmem:[%s1624 + $0x4] sm:$0xf]
    %v1627 = vld [vmem:[%s1624 + $0x8] sm:$0xf]
    %v1628 = vld [vmem:[%s1624 + $0xc] sm:$0xf]
    %v1629 = vld [vmem:[%s1624 + $0x10] sm:$0xf]
    %v1630 = vld [vmem:[%s1624 + $0x14] sm:$0xf]
    %v1631 = vld [vmem:[%s1624 + $0x18] sm:$0xf]
    %v1632 = vld [vmem:[%s1624 + $0x1c] sm:$0xf]
    %s1633 = scalar_lea.vmem %s8, 9
    %v1634 = vld [vmem:[%s1633] sm:$0x1]
    %v1636 = vperm.slane %v1634, 0
    %v1646 = vunpack.c.l.b16 %v1625
    %v1647 = vunpack.c.l.b16 %v1626
    %v1648 = vunpack.c.l.b16 %v1627
    %v1649 = vunpack.c.l.b16 %v1628
    %v1650 = vunpack.c.l.b16 %v1629
    %v1651 = vunpack.c.l.b16 %v1630
    %v1652 = vunpack.c.l.b16 %v1631
    %v1653 = vunpack.c.l.b16 %v1632
    %v1654 = vpack.c.b16 %v1647, %v1646
    %v1655 = vpack.c.b16 %v1649, %v1648
    %v1656 = vpack.c.b16 %v1651, %v1650
    %v1657 = vpack.c.b16 %v1653, %v1652
    %v1663 = vsel %vm896, %v1623, 0
    %1665 = vmatpush.bf16.msra.mxu0 0
    %1666 = vmatpush.bf16.msra.mxu0 0
    %1667 = vmatpush.bf16.msra.mxu0 0
    %1668 = vmatpush.bf16.msra.mxu0 0
    %1669 = vmatpush.bf16.msra.mxu0 %v1657
    %1670 = vmatpush.bf16.msra.mxu0 %v1656
    %1671 = vmatpush.bf16.msra.mxu0 %v1655
    %1672 = vmatpush.bf16.msra.mxu0 %v1654
    %1673 = vmatmul.bf16.gmra.mxu0 %v1663
    %v1674 = vpop.f32.mrf.mxu0
    %v1675 = vadd.f32 %v1636, %v1674
    %v1676 = vpop.f32.mrf.mxu0
    %v1677 = vadd.f32 %v1636, %v1676
    %1678 = vdwg.mxu0
    %v1679 = vadd.f32 %v1563, %v1675
    %v1680 = vadd.f32 %v1564, %v1677
    %s1681 = scalar_lea.vmem %s8, 10
    %v1682 = vld [vmem:[%s1681] sm:$0x1]
    %s1683 = scalar_lea.vmem %s8, 11
    %v1684 = vld [vmem:[%s1683] sm:$0x1]
    %v1685 = vsel %vm134, %v1679, 0.0
    %1686 = vadd.xlane.f32.xlu0 %v1685
    %v1687 = vpop.xlane.xlu0 %1686
    %v1688 = vsel %vm134, %v1680, 0.0
    %1689 = vadd.xlane.f32.xlu0 %v1688
    %v1690 = vpop.xlane.xlu0 %1689
    %v1691 = vmul.f32 %v1687, %v147
    %v1692 = vmul.f32 %v1690, %v147
    %v1693 = vsub.f32 %v1679, %v1691
    %v1694 = vsub.f32 %v1680, %v1692
    %v1695 = vmul.f32 %v1693, %v1693
    %v1696 = vmul.f32 %v1694, %v1694
    %v1697 = vsel %vm134, %v1695, 0.0
    %1698 = vadd.xlane.f32.xlu0 %v1697
    %v1699 = vpop.xlane.xlu0 %1698
    %v1700 = vsel %vm134, %v1696, 0.0
    %1701 = vadd.xlane.f32.xlu0 %v1700
    %v1702 = vpop.xlane.xlu0 %1701
    %v1703 = vmul.f32 %v1699, %v147
    %v1704 = vmul.f32 %v1702, %v147
    %v1705 = vadd.f32 %v1703, 1e-12
    %v1706 = vadd.f32 %v1704, 1e-12
    %v1707 = vrsqrt.pop %v1705
    %v1708 = vmul.f32 %v1707, %v1705
    %v1709 = vmul.f32 %v1708, %v1707
    %v1710 = vmul.f32 0.5, %v1709
    %v1711 = vsub.f32 1.5, %v1710
    %v1712 = vmul.f32 %v1707, %v1711
    %vm1713 = vweird.f32 %v1705
    %vm1714 = vweird.f32 %v1707
    %vm1715 = vmor %vm1713, %vm1714
    %v1716 = vsel %vm1715, %v1707, %v1712
    %v1717 = vrsqrt.pop %v1706
    %v1718 = vmul.f32 %v1717, %v1706
    %v1719 = vmul.f32 %v1718, %v1717
    %v1720 = vmul.f32 0.5, %v1719
    %v1721 = vsub.f32 1.5, %v1720
    %v1722 = vmul.f32 %v1717, %v1721
    %vm1723 = vweird.f32 %v1706
    %vm1724 = vweird.f32 %v1717
    %vm1725 = vmor %vm1723, %vm1724
    %v1726 = vsel %vm1725, %v1717, %v1722
    %v1727 = vmul.f32 %v1693, %v1716
    %v1728 = vmul.f32 %v1694, %v1726
    %v1730 = vperm.slane %v1682, 0
    %v1732 = vmul.f32 %v1727, %v1730
    %v1733 = vmul.f32 %v1728, %v1730
    %v1735 = vperm.slane %v1684, 0
    %v1737 = vadd.f32 %v1732, %v1735
    %v1738 = vadd.f32 %v1733, %v1735
    %v1739 = vld [vmem:[%s12] sm:$0x1]
    %v1740 = vperm.slane %v1739, 0
    %v1741 = vmul.f32 %v1737, %v1740
    %v1742 = vmul.f32 %v1738, %v1740
    %v1745 = vrot.slane %v1742, 7
    %vm1746 = vcmask 1041409
    %v1747 = vsel %vm1746, %v1745, %v1741
    %vm1749 = vcmask 254976
    %v1750 = vsel %vm1749, %v1747, 0.0
    %1751 = vadd.xlane.f32.xlu0 %v1750
    %v1752 = vpop.xlane.xlu0 %1751
    %v1753 = vld [vmem:[%s12 + $0x1] sm:$0x1]
    %v1754 = vperm.slane %v1753, 0
    %v1755 = vadd.f32 %v1752, %v1754
    %vm1756 = vcmask 1024
    %1757 = vst.msk [vmem:[%s14] sm:$0x3] %vm1756, %v1755
    %v1758 = vld [vmem:[%s13] sm:$0x3]
    %v1759 = vmax.f32 %v1755, 0.0
    %v1760 = vmul.f32 %v1755, %v1758
    %v1761 = vsub.f32 %v1759, %v1760
    %v1762 = vand.u32 2147483647, %v1755
    %v1763 = vsub.f32 0.0, %v1762
    %v1764 = vmul.f32 %v1763, 1.442695
    %v1765 = vpow.pop %v1764
    %v1766 = vadd.f32 %v1765, 1.0
    %v1767 = vlog2.pop %v1766
    %v1768 = vmul.f32 %v1767, 0.6931472
    %v1769 = vmul.f32 -0.5, %v1765
    %v1770 = vadd.f32 %v1769, 1.0
    %v1771 = vmul.f32 %v1770, %v1765
    %v1772 = vand.u32 2147483647, %v1765
    %vm1773 = vcmp.lt.f32.partialorder %v1772, 0.0004427343
    %v1774 = vsel %vm1773, %v1771, %v1768
    %v1775 = vadd.f32 %v1761, %v1774
    %v1776 = vsel %vm1756, %v1775, 0.0
    %1777 = vadd.xlane.f32.xlu0 %v1776
    %v1778 = vpop.xlane.xlu0 %1777
    %v1779 = vrot.slane %v1778, 4
    %v1780 = vadd.f32 %v1778, %v1779
    %v1781 = vrot.slane %v1780, 2
    %v1782 = vadd.f32 %v1780, %v1781
    %v1783 = vrot.slane %v1782, 1
    %v1784 = vadd.f32 %v1782, %v1783
    %s1785 = vtos %v1784
    %v1786 = vstv %s1785
    %v1787 = vrcp.pop 2.0
    %v1788 = vmul.f32 2.0, %v1787
    %v1789 = vsub.f32 1.0, %v1788
    %v1790 = vmul.f32 %v1787, %v1789
    %v1791 = vadd.f32 %v1787, %v1790
    %vm1792 = vweird.f32 %v1787
    %v1793 = vsel %vm1792, %v1787, %v1791
    %v1794 = vmul.f32 %v1786, %v1793
    %vm1795 = vcmask 0
    %1796 = vst.msk [vmem:[#allocation2] sm:$0x1] %vm1795, %v1794
    // Predicated region
    $region58: #{tpu_custom_call.1} parent=1 // pred_check
      _
    $region59: #{tpu_custom_call.1} parent=1 // pred_check_branch
      %1798 = sbr.rel (0) target = $region61
    $region60: #{tpu_custom_call.1} parent=1 // pred_region
      _
    $region61: #{tpu_custom_call.1} parent=1 // pred_fallthru
      _
    // Predicated region
    $region62: #{tpu_custom_call.1} parent=1 // pred_check
      _
    $region63: #{tpu_custom_call.1} parent=1 // pred_check_branch
      %1800 = sbr.rel (0) target = $region65
    $region64: #{tpu_custom_call.1} parent=1 // pred_region
      %1802 = vsyncadd [#allocation3], 0
      %s1804 = sshll.u32 [#allocation2], 4
      %s1805 = int_to_ptr.vmem [resolvable:$true] %s1804
      %s1806 = sshll.u32 %s15, 4
      %s1807 = int_to_ptr.hbm [resolvable:$true] %s1806
      %1809 = dma.vmem_to_hbm [thread:$0]  %s1805, 16, %s1807, [#allocation3]
    $region65: #{tpu_custom_call.1} parent=1 // pred_fallthru
      _
    // Predicated region
    $region66: #{tpu_custom_call.1} parent=1 // pred_check
      _
    $region67: #{tpu_custom_call.1} parent=1 // pred_check_branch
      %1811 = sbr.rel (0) target = $region69
    $region68: #{tpu_custom_call.1} parent=1 // pred_region
      _
    $region69: #{tpu_custom_call.1} parent=1 // pred_fallthru
      _
    // Predicated region
    $region70: #{tpu_custom_call.1} parent=1 // pred_check
      _
    $region71: #{tpu_custom_call.1} parent=1 // pred_check_branch
      %1813 = sbr.rel (0) target = $region73
    $region72: #{tpu_custom_call.1} parent=1 // pred_region
      %1815 = dma.done [#allocation3], 16
    $region73: #{tpu_custom_call.1} parent=1 // pred_fallthru
      _
    %1816 = vsyncpa [#allocation3], 1

</llo_original>
